<compile_context>
chip_gen: v6e
topology: v6e:2x2x1
jax: 0.10.0
libtpu: 0.0.40
codegen_flags: <defaults>
</compile_context>

<pallas_src>
import jax
import jax.numpy as jnp
from jax import lax
from jax.experimental import pallas as pl
from jax.experimental.pallas import tpu as pltpu


def _round_up(x, m):
    return (x + m - 1) // m * m


def _sigmoid(v):
    # EUP-friendly sigmoid (single tanh, no divide on the VALU slot).
    return 0.5 * (jnp.tanh(0.5 * v) + 1.0)


# --------------------------- Pallas GRU kernel ------------------------------

def gru_dir_kernel(x_ref, wih_ref, whh_ref, bias_ref, bhn_ref,
                   hids_ref, hn_ref, gi_scr):
    """One GRU direction for the whole sequence (grid axis = direction).

    x_ref    : (T*BP, DP)   padded, time-major layer input (shared by dirs).
    wih_ref  : (DP, 3*HP)   padded, pre-transposed input weights of this dir.
    whh_ref  : (HP, 3*HP)   padded, pre-transposed recurrent weights.
    bias_ref : (1, 3*HP)    b_ih (all gates) + b_hh (r,z gates), gate-padded.
    bhn_ref  : (1, HP)      hidden bias of the n gate (kept separate: r*(.)).
    hids_ref : (T, BP, HP)  this direction's 128-lane slab of the hids output.
    hn_ref   : (BP, HP)     this direction's slab of the final hidden state.
    gi_scr   : (T*BP, 3*HP) VMEM scratch holding the fused input projection.
    """
    T, BP, HP = hids_ref.shape
    d = pl.program_id(0)                       # 0 = forward, 1 = reverse

    # Fused input projection for the whole sequence: ONE lane-dense MXU
    # matmul with the weights resident in VMEM (no gi HBM round trip).
    gi_scr[...] = (jnp.dot(x_ref[...], wih_ref[...],
                           preferred_element_type=jnp.float32)
                   + bias_ref[...])

    whh = whh_ref[...]                                   # resident all T steps
    bhn_full = jnp.broadcast_to(bhn_ref[...], (BP, HP))  # hoisted broadcast

    def step(t, h):
        # Forward walks 0..T-1, reverse walks T-1..0.
        td = jnp.where(d == 0, t, T - 1 - t)
        row = pl.multiple_of(td * BP, BP)
        gi_t = gi_scr[pl.ds(row, BP), :]                 # (BP, 3*HP), aligned
        gh = jnp.dot(h, whh, preferred_element_type=jnp.float32)

        # All gate slices are 128-lane aligned and full width.
        r = _sigmoid(gi_t[:, 0:HP] + gh[:, 0:HP])
        z = _sigmoid(gi_t[:, HP:2 * HP] + gh[:, HP:2 * HP])
        n = jnp.tanh(gi_t[:, 2 * HP:3 * HP]
                     + r * (gh[:, 2 * HP:3 * HP] + bhn_full))
        h_new = (1.0 - z) * n + z * h

        hids_ref[td] = h_new                             # lane-dense 128 store
        return h_new

    h0 = jnp.zeros((BP, HP), jnp.float32)
    h_last = lax.fori_loop(0, T, step, h0, unroll=min(T, 8))
    hn_ref[...] = h_last


def gru_layer(x2d, packed, *, seq_len, BP, num_dir):
    """One (bi)directional GRU layer. x2d: (T*BP, DP) padded, time-major."""
    TB, DP = x2d.shape
    T = seq_len
    HP = packed["bhn"].shape[-1]
    GP = packed["bias"].shape[-1]        # 3 * HP

    hids, hn = pl.pallas_call(
        gru_dir_kernel,
        out_shape=(jax.ShapeDtypeStruct((T, BP, num_dir * HP), jnp.float32),
                   jax.ShapeDtypeStruct((BP, num_dir * HP), jnp.float32)),
        grid_spec=pltpu.PrefetchScalarGridSpec(
            num_scalar_prefetch=0,
            grid=(num_dir,),                                    # dir parallel
            in_specs=[
                pl.BlockSpec((TB, DP), lambda d: (0, 0)),       # x (shared)
                pl.BlockSpec((None, DP, GP), lambda d: (d, 0, 0)),   # wih[d]
                pl.BlockSpec((None, HP, GP), lambda d: (d, 0, 0)),   # whh[d]
                pl.BlockSpec((None, 1, GP), lambda d: (d, 0, 0)),    # bias[d]
                pl.BlockSpec((None, 1, HP), lambda d: (d, 0, 0)),    # bhn[d]
            ],
            out_specs=[
                pl.BlockSpec((T, BP, HP), lambda d: (0, 0, d)),  # hids slab d
                pl.BlockSpec((BP, HP), lambda d: (0, d)),        # h_n slab d
            ],
            scratch_shapes=[pltpu.VMEM((TB, GP), jnp.float32)]),
        compiler_params=pltpu.CompilerParams(
            dimension_semantics=("parallel",)),                  # 2 TCs on v7x
    )(x2d, packed["wih"], packed["whh"], packed["bias"], packed["bhn"])
    return hids, hn


# ----------------------- padded parameter packing ---------------------------

def _pack_dir_params(w, H, HP, DP, row_map):
    """Pad one direction's GRU weights to 128-lane gate blocks (zeros outside
    the real rows/cols so padded lanes never contaminate the K-reduction)."""
    GP = 3 * HP
    wih_t = w["wih"].T.astype(jnp.float32)          # (D_real, 3H), gates [r,z,n]
    whh_t = w["whh"].T.astype(jnp.float32)          # (H, 3H)

    def pad_gate_cols(m):
        out = jnp.zeros((m.shape[0], GP), jnp.float32)
        for g in range(3):
            out = out.at[:, g * HP:g * HP + H].set(m[:, g * H:(g + 1) * H])
        return out

    wih_g = pad_gate_cols(wih_t)
    wih_p = jnp.zeros((DP, GP), jnp.float32)
    for src, dst, ln in row_map:                    # scatter real input rows
        wih_p = wih_p.at[dst:dst + ln].set(wih_g[src:src + ln])

    whh_p = jnp.zeros((HP, GP), jnp.float32).at[:H].set(pad_gate_cols(whh_t))

    # Fold b_ih (all gates) + b_hh (r, z gates) into the gi precompute.
    folded = w["bih"] + jnp.concatenate(
        [w["bhh"][:2 * H], jnp.zeros((H,), jnp.float32)])
    bias_p = jnp.zeros((1, GP), jnp.float32)
    for g in range(3):
        bias_p = bias_p.at[0, g * HP:g * HP + H].set(folded[g * H:(g + 1) * H])

    bhn_p = jnp.zeros((1, HP), jnp.float32).at[0, :H].set(w["bhh"][2 * H:])
    return wih_p, whh_p, bias_p, bhn_p


def _pack_layer_params(rnn_params, layer, num_dir, H, HP, DP, row_map):
    packs = [_pack_dir_params(rnn_params[(layer, d)], H, HP, DP, row_map)
             for d in range(num_dir)]
    return {
        "wih": jnp.stack([p[0] for p in packs]),    # (nd, DP, 3*HP)
        "whh": jnp.stack([p[1] for p in packs]),    # (nd, HP, 3*HP)
        "bias": jnp.stack([p[2] for p in packs]),   # (nd, 1, 3*HP)
        "bhn": jnp.stack([p[3] for p in packs]),    # (nd, 1, HP)
    }


# ------------------------------ forward pass --------------------------------

def utt_encoder_forward(params, token_ids):
    """Pallas-backed forward of UttEncoder (eval mode, input_lens=None)."""
    emb = params["embedding"]
    n_layers = params["n_layers"]
    num_dir = 2 if params["bidirectional"] else 1
    H = params["hidden_size"]
    E = emb.shape[1]
    B, T = token_ids.shape

    HP = _round_up(H, 128)            # 128-lane-padded hidden slab per dir
    BP = _round_up(B, 8)              # full sublane tile
    EP = _round_up(E, 128)

    # Embedding gather straight into padded, time-major layout (only ids are
    # "transposed").  F.dropout(p=0.5, training=False) -> identity.
    x = jnp.take(emb, token_ids.T, axis=0).astype(jnp.float32)       # (T,B,E)
    x_pad = jnp.zeros((T, BP, EP), jnp.float32).at[:, :B, :E].set(x)
    x2d = x_pad.reshape(T * BP, EP)

    hids_pad, hn_pad = None, None
    for l in range(n_layers):
        if l == 0:
            DP, row_map = EP, [(0, 0, E)]
        else:
            DP = num_dir * HP
            row_map = [(d * H, d * HP, H) for d in range(num_dir)]
        packed = _pack_layer_params(params["rnn"], l, num_dir, H, HP, DP,
                                    row_map)
        hids_pad, hn_pad = gru_layer(x2d, packed, seq_len=T, BP=BP,
                                     num_dir=num_dir)
        # Hidden states stay in padded per-direction layout between layers.
        x2d = hids_pad.reshape(T * BP, num_dir * HP)

    # Repack padded per-direction slabs to the tight PyTorch layouts.
    dir_cols = [slice(d * HP, d * HP + H) for d in range(num_dir)]
    hids_tight = jnp.concatenate([hids_pad[:, :B, c] for c in dir_cols],
                                 axis=-1)                         # (T,B,nd*H)
    hids_out = jnp.transpose(hids_tight, (1, 0, 2))               # (B,T,nd*H)
    enc = jnp.concatenate([hn_pad[:B, c] for c in dir_cols], axis=-1)
    return enc, hids_out


# ---------------- pure-JAX reference (for correctness check) ----------------

def _gru_dir_ref(x_tbd, wih, whh, bih, bhh, reverse):
    T, B, _ = x_tbd.shape
    H = whh.shape[1]
    xs = jnp.flip(x_tbd, 0) if reverse else x_tbd

    def step(h, xt):
        gi = xt @ wih.T + bih
        gh = h @ whh.T + bhh
        r = _sigmoid(gi[:, :H] + gh[:, :H])
        z = _sigmoid(gi[:, H:2 * H] + gh[:, H:2 * H])
        n = jnp.tanh(gi[:, 2 * H:] + r * gh[:, 2 * H:])
        h_new = (1.0 - z) * n + z * h
        return h_new, h_new

    h0 = jnp.zeros((B, H), jnp.float32)
    hn, hs = jax.lax.scan(step, h0, xs)
    if reverse:
        hs = jnp.flip(hs, 0)
    return hs, hn


def utt_encoder_ref(params, token_ids):
    n_layers = params["n_layers"]
    num_dir = 2 if params["bidirectional"] else 1
    B = token_ids.shape[0]
    x = jnp.take(params["embedding"], token_ids, axis=0).astype(jnp.float32)
    layer_in = jnp.transpose(x, (1, 0, 2))
    h_n_last = None
    for l in range(n_layers):
        dir_hids, dir_hn = [], []
        for d in range(num_dir):
            w = params["rnn"][(l, d)]
            hids, hn = _gru_dir_ref(layer_in, w["wih"], w["whh"],
                                    w["bih"], w["bhh"], reverse=(d == 1))
            dir_hids.append(hids)
            dir_hn.append(hn)
        layer_in = jnp.concatenate(dir_hids, axis=-1)
        h_n_last = jnp.stack(dir_hn, axis=0)
    hids_out = jnp.transpose(layer_in, (1, 0, 2))
    enc = jnp.transpose(h_n_last, (1, 0, 2)).reshape(B, -1)
    return enc, hids_out


# ---------------------------------- main -----------------------------------

if __name__ == "__main__":
    # Small deterministic configuration consistent with the module.
    V, E, H = 50, 16, 32            # vocab, input_size (=embed dim), hidden_size
    B, T = 2, 8                     # batch, seq_len
    n_layers, bidirectional = 2, True
    num_dir = 2 if bidirectional else 1

    key = jax.random.PRNGKey(0)
    key, k_emb = jax.random.split(key)
    params = {
        "embedding": 0.1 * jax.random.normal(k_emb, (V, E), jnp.float32),
        "n_layers": n_layers,
        "bidirectional": bidirectional,
        "hidden_size": H,
        "rnn": {},
    }
    for l in range(n_layers):
        D = E if l == 0 else num_dir * H
        for d in range(num_dir):
            key, k1, k2, k3, k4 = jax.random.split(key, 5)
            params["rnn"][(l, d)] = {
                "wih": 0.1 * jax.random.normal(k1, (3 * H, D), jnp.float32),
                "whh": 0.1 * jax.random.normal(k2, (3 * H, H), jnp.float32),
                "bih": 0.1 * jax.random.normal(k3, (3 * H,), jnp.float32),
                "bhh": 0.1 * jax.random.normal(k4, (3 * H,), jnp.float32),
            }

    key, k_ids = jax.random.split(key)
    token_ids = jax.random.randint(k_ids, (B, T), 0, V, dtype=jnp.int32)

    enc, hids = utt_encoder_forward(params, token_ids)
    jax.block_until_ready(enc)
    jax.block_until_ready(hids)

    enc_ref, hids_ref_out = utt_encoder_ref(params, token_ids)
    assert enc.shape == (B, num_dir * H)
    assert hids.shape == (B, T, num_dir * H)
    assert jnp.allclose(enc, enc_ref, atol=1e-4, rtol=1e-4)
    assert jnp.allclose(hids, hids_ref_out, atol=1e-4, rtol=1e-4)

    print("KERNEL_OK")
</pallas_src>

<mosaic_0001>
module attributes {stable_mosaic.version = 11 : i64} {
  func.func @gru_dir_kernel(%arg0: i32, %arg1: memref<64x128xf32, #tpu.memory_space<vmem>>, %arg2: memref<1x128x384xf32, #tpu.memory_space<vmem>>, %arg3: memref<1x128x384xf32, #tpu.memory_space<vmem>>, %arg4: memref<1x1x384xf32, #tpu.memory_space<vmem>>, %arg5: memref<1x1x128xf32, #tpu.memory_space<vmem>>, %arg6: memref<8x8x128xf32, #tpu.memory_space<vmem>>, %arg7: memref<8x128xf32, #tpu.memory_space<vmem>>, %arg8: memref<64x384xf32, #tpu.memory_space<vmem>>) attributes {dimension_semantics = [#tpu.dimension_semantics<parallel>], iteration_bounds = array<i64: 2>, scalar_prefetch = 0 : i64, scratch_operands = 1 : i64, tpu.core_type = #tpu.core_type<tc>, window_params = [{pipeline_mode = #tpu.pipeline_mode<synchronous>, transform_indices = @transform_0, window_bounds = array<i64: 64, 128>}, {transform_indices = @transform_1, window_bounds = array<i64: 1, 128, 384>}, {transform_indices = @transform_2, window_bounds = array<i64: 1, 128, 384>}, {transform_indices = @transform_3, window_bounds = array<i64: 1, 1, 384>}, {transform_indices = @transform_4, window_bounds = array<i64: 1, 1, 128>}, {transform_indices = @transform_5, window_bounds = array<i64: 8, 8, 128>}, {transform_indices = @transform_6, window_bounds = array<i64: 8, 128>}]} {
    %c0 = arith.constant 0 : index
    %c0_0 = arith.constant 0 : index
    %0 = vector.load %arg1[%c0, %c0_0] : memref<64x128xf32, #tpu.memory_space<vmem>>, vector<64x128xf32>
    %c0_1 = arith.constant 0 : index
    %c0_2 = arith.constant 0 : index
    %c0_3 = arith.constant 0 : index
    %1 = vector.load %arg2[%c0_1, %c0_2, %c0_3] : memref<1x128x384xf32, #tpu.memory_space<vmem>>, vector<1x128x384xf32>
    %2 = vector.shape_cast %1 : vector<1x128x384xf32> to vector<128x384xf32>
    %cst = arith.constant dense<0.000000e+00> : vector<64x384xf32>
    %3 = tpu.matmul %0, %2, %cst {dimension_numbers = #tpu.dot_dimension_numbers<[1], [0], [0], [1], [0, 0, 1, 1], [], []>} : vector<64x128xf32>, vector<128x384xf32>, vector<64x384xf32> -> vector<64x384xf32>
    %c0_4 = arith.constant 0 : index
    %c0_5 = arith.constant 0 : index
    %c0_6 = arith.constant 0 : index
    %4 = vector.load %arg4[%c0_4, %c0_5, %c0_6] : memref<1x1x384xf32, #tpu.memory_space<vmem>>, vector<1x1x384xf32>
    %5 = vector.shape_cast %4 : vector<1x1x384xf32> to vector<1x384xf32>
    %6 = vector.broadcast %5 : vector<1x384xf32> to vector<64x384xf32>
    %7 = arith.addf %3, %6 : vector<64x384xf32>
    %c0_7 = arith.constant 0 : index
    %c0_8 = arith.constant 0 : index
    %8 = vector.load %arg8[%c0_7, %c0_8] : memref<64x384xf32, #tpu.memory_space<vmem>>, vector<64x384xf32>
    tpu.vector_store %arg8[%c0_7, %c0_8], %7 {strides = array<i32>} : memref<64x384xf32, #tpu.memory_space<vmem>>, vector<64x384xf32>,
    %c0_9 = arith.constant 0 : index
    %c0_10 = arith.constant 0 : index
    %c0_11 = arith.constant 0 : index
    %9 = vector.load %arg3[%c0_9, %c0_10, %c0_11] : memref<1x128x384xf32, #tpu.memory_space<vmem>>, vector<1x128x384xf32>
    %10 = vector.shape_cast %9 : vector<1x128x384xf32> to vector<128x384xf32>
    %c0_12 = arith.constant 0 : index
    %c0_13 = arith.constant 0 : index
    %c0_14 = arith.constant 0 : index
    %11 = vector.load %arg5[%c0_12, %c0_13, %c0_14] : memref<1x1x128xf32, #tpu.memory_space<vmem>>, vector<1x1x128xf32>
    %12 = vector.shape_cast %11 : vector<1x1x128xf32> to vector<1x128xf32>
    %13 = vector.shape_cast %12 : vector<1x128xf32> to vector<1x128xf32>
    %14 = vector.broadcast %13 : vector<1x128xf32> to vector<8x128xf32>
    %cst_15 = arith.constant 0.000000e+00 : f32
    %15 = vector.broadcast %cst_15 : f32 to vector<8x128xf32>
    %c0_i32 = arith.constant 0 : i32
    %c0_i32_16 = arith.constant 0 : i32
    %16 = arith.cmpi eq, %arg0, %c0_i32_16 : i32
    %c7_i32 = arith.constant 7 : i32
    %17 = arith.subi %c7_i32, %c0_i32 : i32
    %18 = arith.select %16, %c0_i32, %17 : i32
    %c8_i32 = arith.constant 8 : i32
    %19 = arith.muli %18, %c8_i32 : i32
    %20 = tpu.assume_multiple %19, 8 : i32
    %21 = arith.index_cast %20 : i32 to index
    %c0_17 = arith.constant 0 : index
    %22 = vector.load %arg8[%21, %c0_17] : memref<64x384xf32, #tpu.memory_space<vmem>>, vector<8x384xf32>
    %cst_18 = arith.constant dense<0.000000e+00> : vector<8x384xf32>
    %23 = tpu.matmul %15, %10, %cst_18 {dimension_numbers = #tpu.dot_dimension_numbers<[1], [0], [0], [1], [0, 0, 1, 1], [], []>} : vector<8x128xf32>, vector<128x384xf32>, vector<8x384xf32> -> vector<8x384xf32>
    %24 = vector.extract_strided_slice %22 {offsets = [0, 0], sizes = [8, 128], strides = [1, 1]} : vector<8x384xf32> to vector<8x128xf32>
    %25 = vector.extract_strided_slice %23 {offsets = [0, 0], sizes = [8, 128], strides = [1, 1]} : vector<8x384xf32> to vector<8x128xf32>
    %26 = arith.addf %24, %25 : vector<8x128xf32>
    %cst_19 = arith.constant 5.000000e-01 : f32
    %27 = vector.broadcast %cst_19 : f32 to vector<8x128xf32>
    %28 = arith.mulf %27, %26 : vector<8x128xf32>
    %29 = math.tanh %28 : vector<8x128xf32>
    %cst_20 = arith.constant 1.000000e+00 : f32
    %30 = vector.broadcast %cst_20 : f32 to vector<8x128xf32>
    %31 = arith.addf %29, %30 : vector<8x128xf32>
    %cst_21 = arith.constant 5.000000e-01 : f32
    %32 = vector.broadcast %cst_21 : f32 to vector<8x128xf32>
    %33 = arith.mulf %32, %31 : vector<8x128xf32>
    %34 = vector.extract_strided_slice %22 {offsets = [0, 128], sizes = [8, 128], strides = [1, 1]} : vector<8x384xf32> to vector<8x128xf32>
    %35 = vector.extract_strided_slice %23 {offsets = [0, 128], sizes = [8, 128], strides = [1, 1]} : vector<8x384xf32> to vector<8x128xf32>
    %36 = arith.addf %34, %35 : vector<8x128xf32>
    %cst_22 = arith.constant 5.000000e-01 : f32
    %37 = vector.broadcast %cst_22 : f32 to vector<8x128xf32>
    %38 = arith.mulf %37, %36 : vector<8x128xf32>
    %39 = math.tanh %38 : vector<8x128xf32>
    %cst_23 = arith.constant 1.000000e+00 : f32
    %40 = vector.broadcast %cst_23 : f32 to vector<8x128xf32>
    %41 = arith.addf %39, %40 : vector<8x128xf32>
    %cst_24 = arith.constant 5.000000e-01 : f32
    %42 = vector.broadcast %cst_24 : f32 to vector<8x128xf32>
    %43 = arith.mulf %42, %41 : vector<8x128xf32>
    %44 = vector.extract_strided_slice %22 {offsets = [0, 256], sizes = [8, 128], strides = [1, 1]} : vector<8x384xf32> to vector<8x128xf32>
    %45 = vector.extract_strided_slice %23 {offsets = [0, 256], sizes = [8, 128], strides = [1, 1]} : vector<8x384xf32> to vector<8x128xf32>
    %46 = arith.addf %45, %14 : vector<8x128xf32>
    %47 = arith.mulf %33, %46 : vector<8x128xf32>
    %48 = arith.addf %44, %47 : vector<8x128xf32>
    %49 = math.tanh %48 : vector<8x128xf32>
    %cst_25 = arith.constant 1.000000e+00 : f32
    %50 = vector.broadcast %cst_25 : f32 to vector<8x128xf32>
    %51 = arith.subf %50, %43 : vector<8x128xf32>
    %52 = arith.mulf %51, %49 : vector<8x128xf32>
    %53 = arith.mulf %43, %15 : vector<8x128xf32>
    %54 = arith.addf %52, %53 : vector<8x128xf32>
    %55 = arith.index_cast %18 : i32 to index
    %c0_26 = arith.constant 0 : index
    %c0_27 = arith.constant 0 : index
    %56 = vector.load %arg6[%55, %c0_26, %c0_27] : memref<8x8x128xf32, #tpu.memory_space<vmem>>, vector<1x8x128xf32>
    %57 = vector.shape_cast %56 : vector<1x8x128xf32> to vector<8x128xf32>
    %58 = vector.shape_cast %54 : vector<8x128xf32> to vector<1x8x128xf32>
    tpu.vector_store %arg6[%55, %c0_26, %c0_27], %58 {strides = array<i32>} : memref<8x8x128xf32, #tpu.memory_space<vmem>>, vector<1x8x128xf32>,
    %c1_i32 = arith.constant 1 : i32
    %c0_i32_28 = arith.constant 0 : i32
    %59 = arith.cmpi eq, %arg0, %c0_i32_28 : i32
    %c7_i32_29 = arith.constant 7 : i32
    %60 = arith.subi %c7_i32_29, %c1_i32 : i32
    %61 = arith.select %59, %c1_i32, %60 : i32
    %c8_i32_30 = arith.constant 8 : i32
    %62 = arith.muli %61, %c8_i32_30 : i32
    %63 = tpu.assume_multiple %62, 8 : i32
    %64 = arith.index_cast %63 : i32 to index
    %c0_31 = arith.constant 0 : index
    %65 = vector.load %arg8[%64, %c0_31] : memref<64x384xf32, #tpu.memory_space<vmem>>, vector<8x384xf32>
    %cst_32 = arith.constant dense<0.000000e+00> : vector<8x384xf32>
    %66 = tpu.matmul %54, %10, %cst_32 {dimension_numbers = #tpu.dot_dimension_numbers<[1], [0], [0], [1], [0, 0, 1, 1], [], []>} : vector<8x128xf32>, vector<128x384xf32>, vector<8x384xf32> -> vector<8x384xf32>
    %67 = vector.extract_strided_slice %65 {offsets = [0, 0], sizes = [8, 128], strides = [1, 1]} : vector<8x384xf32> to vector<8x128xf32>
    %68 = vector.extract_strided_slice %66 {offsets = [0, 0], sizes = [8, 128], strides = [1, 1]} : vector<8x384xf32> to vector<8x128xf32>
    %69 = arith.addf %67, %68 : vector<8x128xf32>
    %cst_33 = arith.constant 5.000000e-01 : f32
    %70 = vector.broadcast %cst_33 : f32 to vector<8x128xf32>
    %71 = arith.mulf %70, %69 : vector<8x128xf32>
    %72 = math.tanh %71 : vector<8x128xf32>
    %cst_34 = arith.constant 1.000000e+00 : f32
    %73 = vector.broadcast %cst_34 : f32 to vector<8x128xf32>
    %74 = arith.addf %72, %73 : vector<8x128xf32>
    %cst_35 = arith.constant 5.000000e-01 : f32
    %75 = vector.broadcast %cst_35 : f32 to vector<8x128xf32>
    %76 = arith.mulf %75, %74 : vector<8x128xf32>
    %77 = vector.extract_strided_slice %65 {offsets = [0, 128], sizes = [8, 128], strides = [1, 1]} : vector<8x384xf32> to vector<8x128xf32>
    %78 = vector.extract_strided_slice %66 {offsets = [0, 128], sizes = [8, 128], strides = [1, 1]} : vector<8x384xf32> to vector<8x128xf32>
    %79 = arith.addf %77, %78 : vector<8x128xf32>
    %cst_36 = arith.constant 5.000000e-01 : f32
    %80 = vector.broadcast %cst_36 : f32 to vector<8x128xf32>
    %81 = arith.mulf %80, %79 : vector<8x128xf32>
    %82 = math.tanh %81 : vector<8x128xf32>
    %cst_37 = arith.constant 1.000000e+00 : f32
    %83 = vector.broadcast %cst_37 : f32 to vector<8x128xf32>
    %84 = arith.addf %82, %83 : vector<8x128xf32>
    %cst_38 = arith.constant 5.000000e-01 : f32
    %85 = vector.broadcast %cst_38 : f32 to vector<8x128xf32>
    %86 = arith.mulf %85, %84 : vector<8x128xf32>
    %87 = vector.extract_strided_slice %65 {offsets = [0, 256], sizes = [8, 128], strides = [1, 1]} : vector<8x384xf32> to vector<8x128xf32>
    %88 = vector.extract_strided_slice %66 {offsets = [0, 256], sizes = [8, 128], strides = [1, 1]} : vector<8x384xf32> to vector<8x128xf32>
    %89 = arith.addf %88, %14 : vector<8x128xf32>
    %90 = arith.mulf %76, %89 : vector<8x128xf32>
    %91 = arith.addf %87, %90 : vector<8x128xf32>
    %92 = math.tanh %91 : vector<8x128xf32>
    %cst_39 = arith.constant 1.000000e+00 : f32
    %93 = vector.broadcast %cst_39 : f32 to vector<8x128xf32>
    %94 = arith.subf %93, %86 : vector<8x128xf32>
    %95 = arith.mulf %94, %92 : vector<8x128xf32>
    %96 = arith.mulf %86, %54 : vector<8x128xf32>
    %97 = arith.addf %95, %96 : vector<8x128xf32>
    %98 = arith.index_cast %61 : i32 to index
    %c0_40 = arith.constant 0 : index
    %c0_41 = arith.constant 0 : index
    %99 = vector.load %arg6[%98, %c0_40, %c0_41] : memref<8x8x128xf32, #tpu.memory_space<vmem>>, vector<1x8x128xf32>
    %100 = vector.shape_cast %99 : vector<1x8x128xf32> to vector<8x128xf32>
    %101 = vector.shape_cast %97 : vector<8x128xf32> to vector<1x8x128xf32>
    tpu.vector_store %arg6[%98, %c0_40, %c0_41], %101 {strides = array<i32>} : memref<8x8x128xf32, #tpu.memory_space<vmem>>, vector<1x8x128xf32>,
    %c2_i32 = arith.constant 2 : i32
    %c0_i32_42 = arith.constant 0 : i32
    %102 = arith.cmpi eq, %arg0, %c0_i32_42 : i32
    %c7_i32_43 = arith.constant 7 : i32
    %103 = arith.subi %c7_i32_43, %c2_i32 : i32
    %104 = arith.select %102, %c2_i32, %103 : i32
    %c8_i32_44 = arith.constant 8 : i32
    %105 = arith.muli %104, %c8_i32_44 : i32
    %106 = tpu.assume_multiple %105, 8 : i32
    %107 = arith.index_cast %106 : i32 to index
    %c0_45 = arith.constant 0 : index
    %108 = vector.load %arg8[%107, %c0_45] : memref<64x384xf32, #tpu.memory_space<vmem>>, vector<8x384xf32>
    %cst_46 = arith.constant dense<0.000000e+00> : vector<8x384xf32>
    %109 = tpu.matmul %97, %10, %cst_46 {dimension_numbers = #tpu.dot_dimension_numbers<[1], [0], [0], [1], [0, 0, 1, 1], [], []>} : vector<8x128xf32>, vector<128x384xf32>, vector<8x384xf32> -> vector<8x384xf32>
    %110 = vector.extract_strided_slice %108 {offsets = [0, 0], sizes = [8, 128], strides = [1, 1]} : vector<8x384xf32> to vector<8x128xf32>
    %111 = vector.extract_strided_slice %109 {offsets = [0, 0], sizes = [8, 128], strides = [1, 1]} : vector<8x384xf32> to vector<8x128xf32>
    %112 = arith.addf %110, %111 : vector<8x128xf32>
    %cst_47 = arith.constant 5.000000e-01 : f32
    %113 = vector.broadcast %cst_47 : f32 to vector<8x128xf32>
    %114 = arith.mulf %113, %112 : vector<8x128xf32>
    %115 = math.tanh %114 : vector<8x128xf32>
    %cst_48 = arith.constant 1.000000e+00 : f32
    %116 = vector.broadcast %cst_48 : f32 to vector<8x128xf32>
    %117 = arith.addf %115, %116 : vector<8x128xf32>
    %cst_49 = arith.constant 5.000000e-01 : f32
    %118 = vector.broadcast %cst_49 : f32 to vector<8x128xf32>
    %119 = arith.mulf %118, %117 : vector<8x128xf32>
    %120 = vector.extract_strided_slice %108 {offsets = [0, 128], sizes = [8, 128], strides = [1, 1]} : vector<8x384xf32> to vector<8x128xf32>
    %121 = vector.extract_strided_slice %109 {offsets = [0, 128], sizes = [8, 128], strides = [1, 1]} : vector<8x384xf32> to vector<8x128xf32>
    %122 = arith.addf %120, %121 : vector<8x128xf32>
    %cst_50 = arith.constant 5.000000e-01 : f32
    %123 = vector.broadcast %cst_50 : f32 to vector<8x128xf32>
    %124 = arith.mulf %123, %122 : vector<8x128xf32>
    %125 = math.tanh %124 : vector<8x128xf32>
    %cst_51 = arith.constant 1.000000e+00 : f32
    %126 = vector.broadcast %cst_51 : f32 to vector<8x128xf32>
    %127 = arith.addf %125, %126 : vector<8x128xf32>
    %cst_52 = arith.constant 5.000000e-01 : f32
    %128 = vector.broadcast %cst_52 : f32 to vector<8x128xf32>
    %129 = arith.mulf %128, %127 : vector<8x128xf32>
    %130 = vector.extract_strided_slice %108 {offsets = [0, 256], sizes = [8, 128], strides = [1, 1]} : vector<8x384xf32> to vector<8x128xf32>
    %131 = vector.extract_strided_slice %109 {offsets = [0, 256], sizes = [8, 128], strides = [1, 1]} : vector<8x384xf32> to vector<8x128xf32>
    %132 = arith.addf %131, %14 : vector<8x128xf32>
    %133 = arith.mulf %119, %132 : vector<8x128xf32>
    %134 = arith.addf %130, %133 : vector<8x128xf32>
    %135 = math.tanh %134 : vector<8x128xf32>
    %cst_53 = arith.constant 1.000000e+00 : f32
    %136 = vector.broadcast %cst_53 : f32 to vector<8x128xf32>
    %137 = arith.subf %136, %129 : vector<8x128xf32>
    %138 = arith.mulf %137, %135 : vector<8x128xf32>
    %139 = arith.mulf %129, %97 : vector<8x128xf32>
    %140 = arith.addf %138, %139 : vector<8x128xf32>
    %141 = arith.index_cast %104 : i32 to index
    %c0_54 = arith.constant 0 : index
    %c0_55 = arith.constant 0 : index
    %142 = vector.load %arg6[%141, %c0_54, %c0_55] : memref<8x8x128xf32, #tpu.memory_space<vmem>>, vector<1x8x128xf32>
    %143 = vector.shape_cast %142 : vector<1x8x128xf32> to vector<8x128xf32>
    %144 = vector.shape_cast %140 : vector<8x128xf32> to vector<1x8x128xf32>
    tpu.vector_store %arg6[%141, %c0_54, %c0_55], %144 {strides = array<i32>} : memref<8x8x128xf32, #tpu.memory_space<vmem>>, vector<1x8x128xf32>,
    %c3_i32 = arith.constant 3 : i32
    %c0_i32_56 = arith.constant 0 : i32
    %145 = arith.cmpi eq, %arg0, %c0_i32_56 : i32
    %c7_i32_57 = arith.constant 7 : i32
    %146 = arith.subi %c7_i32_57, %c3_i32 : i32
    %147 = arith.select %145, %c3_i32, %146 : i32
    %c8_i32_58 = arith.constant 8 : i32
    %148 = arith.muli %147, %c8_i32_58 : i32
    %149 = tpu.assume_multiple %148, 8 : i32
    %150 = arith.index_cast %149 : i32 to index
    %c0_59 = arith.constant 0 : index
    %151 = vector.load %arg8[%150, %c0_59] : memref<64x384xf32, #tpu.memory_space<vmem>>, vector<8x384xf32>
    %cst_60 = arith.constant dense<0.000000e+00> : vector<8x384xf32>
    %152 = tpu.matmul %140, %10, %cst_60 {dimension_numbers = #tpu.dot_dimension_numbers<[1], [0], [0], [1], [0, 0, 1, 1], [], []>} : vector<8x128xf32>, vector<128x384xf32>, vector<8x384xf32> -> vector<8x384xf32>
    %153 = vector.extract_strided_slice %151 {offsets = [0, 0], sizes = [8, 128], strides = [1, 1]} : vector<8x384xf32> to vector<8x128xf32>
    %154 = vector.extract_strided_slice %152 {offsets = [0, 0], sizes = [8, 128], strides = [1, 1]} : vector<8x384xf32> to vector<8x128xf32>
    %155 = arith.addf %153, %154 : vector<8x128xf32>
    %cst_61 = arith.constant 5.000000e-01 : f32
    %156 = vector.broadcast %cst_61 : f32 to vector<8x128xf32>
    %157 = arith.mulf %156, %155 : vector<8x128xf32>
    %158 = math.tanh %157 : vector<8x128xf32>
    %cst_62 = arith.constant 1.000000e+00 : f32
    %159 = vector.broadcast %cst_62 : f32 to vector<8x128xf32>
    %160 = arith.addf %158, %159 : vector<8x128xf32>
    %cst_63 = arith.constant 5.000000e-01 : f32
    %161 = vector.broadcast %cst_63 : f32 to vector<8x128xf32>
    %162 = arith.mulf %161, %160 : vector<8x128xf32>
    %163 = vector.extract_strided_slice %151 {offsets = [0, 128], sizes = [8, 128], strides = [1, 1]} : vector<8x384xf32> to vector<8x128xf32>
    %164 = vector.extract_strided_slice %152 {offsets = [0, 128], sizes = [8, 128], strides = [1, 1]} : vector<8x384xf32> to vector<8x128xf32>
    %165 = arith.addf %163, %164 : vector<8x128xf32>
    %cst_64 = arith.constant 5.000000e-01 : f32
    %166 = vector.broadcast %cst_64 : f32 to vector<8x128xf32>
    %167 = arith.mulf %166, %165 : vector<8x128xf32>
    %168 = math.tanh %167 : vector<8x128xf32>
    %cst_65 = arith.constant 1.000000e+00 : f32
    %169 = vector.broadcast %cst_65 : f32 to vector<8x128xf32>
    %170 = arith.addf %168, %169 : vector<8x128xf32>
    %cst_66 = arith.constant 5.000000e-01 : f32
    %171 = vector.broadcast %cst_66 : f32 to vector<8x128xf32>
    %172 = arith.mulf %171, %170 : vector<8x128xf32>
    %173 = vector.extract_strided_slice %151 {offsets = [0, 256], sizes = [8, 128], strides = [1, 1]} : vector<8x384xf32> to vector<8x128xf32>
    %174 = vector.extract_strided_slice %152 {offsets = [0, 256], sizes = [8, 128], strides = [1, 1]} : vector<8x384xf32> to vector<8x128xf32>
    %175 = arith.addf %174, %14 : vector<8x128xf32>
    %176 = arith.mulf %162, %175 : vector<8x128xf32>
    %177 = arith.addf %173, %176 : vector<8x128xf32>
    %178 = math.tanh %177 : vector<8x128xf32>
    %cst_67 = arith.constant 1.000000e+00 : f32
    %179 = vector.broadcast %cst_67 : f32 to vector<8x128xf32>
    %180 = arith.subf %179, %172 : vector<8x128xf32>
    %181 = arith.mulf %180, %178 : vector<8x128xf32>
    %182 = arith.mulf %172, %140 : vector<8x128xf32>
    %183 = arith.addf %181, %182 : vector<8x128xf32>
    %184 = arith.index_cast %147 : i32 to index
    %c0_68 = arith.constant 0 : index
    %c0_69 = arith.constant 0 : index
    %185 = vector.load %arg6[%184, %c0_68, %c0_69] : memref<8x8x128xf32, #tpu.memory_space<vmem>>, vector<1x8x128xf32>
    %186 = vector.shape_cast %185 : vector<1x8x128xf32> to vector<8x128xf32>
    %187 = vector.shape_cast %183 : vector<8x128xf32> to vector<1x8x128xf32>
    tpu.vector_store %arg6[%184, %c0_68, %c0_69], %187 {strides = array<i32>} : memref<8x8x128xf32, #tpu.memory_space<vmem>>, vector<1x8x128xf32>,
    %c4_i32 = arith.constant 4 : i32
    %c0_i32_70 = arith.constant 0 : i32
    %188 = arith.cmpi eq, %arg0, %c0_i32_70 : i32
    %c7_i32_71 = arith.constant 7 : i32
    %189 = arith.subi %c7_i32_71, %c4_i32 : i32
    %190 = arith.select %188, %c4_i32, %189 : i32
    %c8_i32_72 = arith.constant 8 : i32
    %191 = arith.muli %190, %c8_i32_72 : i32
    %192 = tpu.assume_multiple %191, 8 : i32
    %193 = arith.index_cast %192 : i32 to index
    %c0_73 = arith.constant 0 : index
    %194 = vector.load %arg8[%193, %c0_73] : memref<64x384xf32, #tpu.memory_space<vmem>>, vector<8x384xf32>
    %cst_74 = arith.constant dense<0.000000e+00> : vector<8x384xf32>
    %195 = tpu.matmul %183, %10, %cst_74 {dimension_numbers = #tpu.dot_dimension_numbers<[1], [0], [0], [1], [0, 0, 1, 1], [], []>} : vector<8x128xf32>, vector<128x384xf32>, vector<8x384xf32> -> vector<8x384xf32>
    %196 = vector.extract_strided_slice %194 {offsets = [0, 0], sizes = [8, 128], strides = [1, 1]} : vector<8x384xf32> to vector<8x128xf32>
    %197 = vector.extract_strided_slice %195 {offsets = [0, 0], sizes = [8, 128], strides = [1, 1]} : vector<8x384xf32> to vector<8x128xf32>
    %198 = arith.addf %196, %197 : vector<8x128xf32>
    %cst_75 = arith.constant 5.000000e-01 : f32
    %199 = vector.broadcast %cst_75 : f32 to vector<8x128xf32>
    %200 = arith.mulf %199, %198 : vector<8x128xf32>
    %201 = math.tanh %200 : vector<8x128xf32>
    %cst_76 = arith.constant 1.000000e+00 : f32
    %202 = vector.broadcast %cst_76 : f32 to vector<8x128xf32>
    %203 = arith.addf %201, %202 : vector<8x128xf32>
    %cst_77 = arith.constant 5.000000e-01 : f32
    %204 = vector.broadcast %cst_77 : f32 to vector<8x128xf32>
    %205 = arith.mulf %204, %203 : vector<8x128xf32>
    %206 = vector.extract_strided_slice %194 {offsets = [0, 128], sizes = [8, 128], strides = [1, 1]} : vector<8x384xf32> to vector<8x128xf32>
    %207 = vector.extract_strided_slice %195 {offsets = [0, 128], sizes = [8, 128], strides = [1, 1]} : vector<8x384xf32> to vector<8x128xf32>
    %208 = arith.addf %206, %207 : vector<8x128xf32>
    %cst_78 = arith.constant 5.000000e-01 : f32
    %209 = vector.broadcast %cst_78 : f32 to vector<8x128xf32>
    %210 = arith.mulf %209, %208 : vector<8x128xf32>
    %211 = math.tanh %210 : vector<8x128xf32>
    %cst_79 = arith.constant 1.000000e+00 : f32
    %212 = vector.broadcast %cst_79 : f32 to vector<8x128xf32>
    %213 = arith.addf %211, %212 : vector<8x128xf32>
    %cst_80 = arith.constant 5.000000e-01 : f32
    %214 = vector.broadcast %cst_80 : f32 to vector<8x128xf32>
    %215 = arith.mulf %214, %213 : vector<8x128xf32>
    %216 = vector.extract_strided_slice %194 {offsets = [0, 256], sizes = [8, 128], strides = [1, 1]} : vector<8x384xf32> to vector<8x128xf32>
    %217 = vector.extract_strided_slice %195 {offsets = [0, 256], sizes = [8, 128], strides = [1, 1]} : vector<8x384xf32> to vector<8x128xf32>
    %218 = arith.addf %217, %14 : vector<8x128xf32>
    %219 = arith.mulf %205, %218 : vector<8x128xf32>
    %220 = arith.addf %216, %219 : vector<8x128xf32>
    %221 = math.tanh %220 : vector<8x128xf32>
    %cst_81 = arith.constant 1.000000e+00 : f32
    %222 = vector.broadcast %cst_81 : f32 to vector<8x128xf32>
    %223 = arith.subf %222, %215 : vector<8x128xf32>
    %224 = arith.mulf %223, %221 : vector<8x128xf32>
    %225 = arith.mulf %215, %183 : vector<8x128xf32>
    %226 = arith.addf %224, %225 : vector<8x128xf32>
    %227 = arith.index_cast %190 : i32 to index
    %c0_82 = arith.constant 0 : index
    %c0_83 = arith.constant 0 : index
    %228 = vector.load %arg6[%227, %c0_82, %c0_83] : memref<8x8x128xf32, #tpu.memory_space<vmem>>, vector<1x8x128xf32>
    %229 = vector.shape_cast %228 : vector<1x8x128xf32> to vector<8x128xf32>
    %230 = vector.shape_cast %226 : vector<8x128xf32> to vector<1x8x128xf32>
    tpu.vector_store %arg6[%227, %c0_82, %c0_83], %230 {strides = array<i32>} : memref<8x8x128xf32, #tpu.memory_space<vmem>>, vector<1x8x128xf32>,
    %c5_i32 = arith.constant 5 : i32
    %c0_i32_84 = arith.constant 0 : i32
    %231 = arith.cmpi eq, %arg0, %c0_i32_84 : i32
    %c7_i32_85 = arith.constant 7 : i32
    %232 = arith.subi %c7_i32_85, %c5_i32 : i32
    %233 = arith.select %231, %c5_i32, %232 : i32
    %c8_i32_86 = arith.constant 8 : i32
    %234 = arith.muli %233, %c8_i32_86 : i32
    %235 = tpu.assume_multiple %234, 8 : i32
    %236 = arith.index_cast %235 : i32 to index
    %c0_87 = arith.constant 0 : index
    %237 = vector.load %arg8[%236, %c0_87] : memref<64x384xf32, #tpu.memory_space<vmem>>, vector<8x384xf32>
    %cst_88 = arith.constant dense<0.000000e+00> : vector<8x384xf32>
    %238 = tpu.matmul %226, %10, %cst_88 {dimension_numbers = #tpu.dot_dimension_numbers<[1], [0], [0], [1], [0, 0, 1, 1], [], []>} : vector<8x128xf32>, vector<128x384xf32>, vector<8x384xf32> -> vector<8x384xf32>
    %239 = vector.extract_strided_slice %237 {offsets = [0, 0], sizes = [8, 128], strides = [1, 1]} : vector<8x384xf32> to vector<8x128xf32>
    %240 = vector.extract_strided_slice %238 {offsets = [0, 0], sizes = [8, 128], strides = [1, 1]} : vector<8x384xf32> to vector<8x128xf32>
    %241 = arith.addf %239, %240 : vector<8x128xf32>
    %cst_89 = arith.constant 5.000000e-01 : f32
    %242 = vector.broadcast %cst_89 : f32 to vector<8x128xf32>
    %243 = arith.mulf %242, %241 : vector<8x128xf32>
    %244 = math.tanh %243 : vector<8x128xf32>
    %cst_90 = arith.constant 1.000000e+00 : f32
    %245 = vector.broadcast %cst_90 : f32 to vector<8x128xf32>
    %246 = arith.addf %244, %245 : vector<8x128xf32>
    %cst_91 = arith.constant 5.000000e-01 : f32
    %247 = vector.broadcast %cst_91 : f32 to vector<8x128xf32>
    %248 = arith.mulf %247, %246 : vector<8x128xf32>
    %249 = vector.extract_strided_slice %237 {offsets = [0, 128], sizes = [8, 128], strides = [1, 1]} : vector<8x384xf32> to vector<8x128xf32>
    %250 = vector.extract_strided_slice %238 {offsets = [0, 128], sizes = [8, 128], strides = [1, 1]} : vector<8x384xf32> to vector<8x128xf32>
    %251 = arith.addf %249, %250 : vector<8x128xf32>
    %cst_92 = arith.constant 5.000000e-01 : f32
    %252 = vector.broadcast %cst_92 : f32 to vector<8x128xf32>
    %253 = arith.mulf %252, %251 : vector<8x128xf32>
    %254 = math.tanh %253 : vector<8x128xf32>
    %cst_93 = arith.constant 1.000000e+00 : f32
    %255 = vector.broadcast %cst_93 : f32 to vector<8x128xf32>
    %256 = arith.addf %254, %255 : vector<8x128xf32>
    %cst_94 = arith.constant 5.000000e-01 : f32
    %257 = vector.broadcast %cst_94 : f32 to vector<8x128xf32>
    %258 = arith.mulf %257, %256 : vector<8x128xf32>
    %259 = vector.extract_strided_slice %237 {offsets = [0, 256], sizes = [8, 128], strides = [1, 1]} : vector<8x384xf32> to vector<8x128xf32>
    %260 = vector.extract_strided_slice %238 {offsets = [0, 256], sizes = [8, 128], strides = [1, 1]} : vector<8x384xf32> to vector<8x128xf32>
    %261 = arith.addf %260, %14 : vector<8x128xf32>
    %262 = arith.mulf %248, %261 : vector<8x128xf32>
    %263 = arith.addf %259, %262 : vector<8x128xf32>
    %264 = math.tanh %263 : vector<8x128xf32>
    %cst_95 = arith.constant 1.000000e+00 : f32
    %265 = vector.broadcast %cst_95 : f32 to vector<8x128xf32>
    %266 = arith.subf %265, %258 : vector<8x128xf32>
    %267 = arith.mulf %266, %264 : vector<8x128xf32>
    %268 = arith.mulf %258, %226 : vector<8x128xf32>
    %269 = arith.addf %267, %268 : vector<8x128xf32>
    %270 = arith.index_cast %233 : i32 to index
    %c0_96 = arith.constant 0 : index
    %c0_97 = arith.constant 0 : index
    %271 = vector.load %arg6[%270, %c0_96, %c0_97] : memref<8x8x128xf32, #tpu.memory_space<vmem>>, vector<1x8x128xf32>
    %272 = vector.shape_cast %271 : vector<1x8x128xf32> to vector<8x128xf32>
    %273 = vector.shape_cast %269 : vector<8x128xf32> to vector<1x8x128xf32>
    tpu.vector_store %arg6[%270, %c0_96, %c0_97], %273 {strides = array<i32>} : memref<8x8x128xf32, #tpu.memory_space<vmem>>, vector<1x8x128xf32>,
    %c6_i32 = arith.constant 6 : i32
    %c0_i32_98 = arith.constant 0 : i32
    %274 = arith.cmpi eq, %arg0, %c0_i32_98 : i32
    %c7_i32_99 = arith.constant 7 : i32
    %275 = arith.subi %c7_i32_99, %c6_i32 : i32
    %276 = arith.select %274, %c6_i32, %275 : i32
    %c8_i32_100 = arith.constant 8 : i32
    %277 = arith.muli %276, %c8_i32_100 : i32
    %278 = tpu.assume_multiple %277, 8 : i32
    %279 = arith.index_cast %278 : i32 to index
    %c0_101 = arith.constant 0 : index
    %280 = vector.load %arg8[%279, %c0_101] : memref<64x384xf32, #tpu.memory_space<vmem>>, vector<8x384xf32>
    %cst_102 = arith.constant dense<0.000000e+00> : vector<8x384xf32>
    %281 = tpu.matmul %269, %10, %cst_102 {dimension_numbers = #tpu.dot_dimension_numbers<[1], [0], [0], [1], [0, 0, 1, 1], [], []>} : vector<8x128xf32>, vector<128x384xf32>, vector<8x384xf32> -> vector<8x384xf32>
    %282 = vector.extract_strided_slice %280 {offsets = [0, 0], sizes = [8, 128], strides = [1, 1]} : vector<8x384xf32> to vector<8x128xf32>
    %283 = vector.extract_strided_slice %281 {offsets = [0, 0], sizes = [8, 128], strides = [1, 1]} : vector<8x384xf32> to vector<8x128xf32>
    %284 = arith.addf %282, %283 : vector<8x128xf32>
    %cst_103 = arith.constant 5.000000e-01 : f32
    %285 = vector.broadcast %cst_103 : f32 to vector<8x128xf32>
    %286 = arith.mulf %285, %284 : vector<8x128xf32>
    %287 = math.tanh %286 : vector<8x128xf32>
    %cst_104 = arith.constant 1.000000e+00 : f32
    %288 = vector.broadcast %cst_104 : f32 to vector<8x128xf32>
    %289 = arith.addf %287, %288 : vector<8x128xf32>
    %cst_105 = arith.constant 5.000000e-01 : f32
    %290 = vector.broadcast %cst_105 : f32 to vector<8x128xf32>
    %291 = arith.mulf %290, %289 : vector<8x128xf32>
    %292 = vector.extract_strided_slice %280 {offsets = [0, 128], sizes = [8, 128], strides = [1, 1]} : vector<8x384xf32> to vector<8x128xf32>
    %293 = vector.extract_strided_slice %281 {offsets = [0, 128], sizes = [8, 128], strides = [1, 1]} : vector<8x384xf32> to vector<8x128xf32>
    %294 = arith.addf %292, %293 : vector<8x128xf32>
    %cst_106 = arith.constant 5.000000e-01 : f32
    %295 = vector.broadcast %cst_106 : f32 to vector<8x128xf32>
    %296 = arith.mulf %295, %294 : vector<8x128xf32>
    %297 = math.tanh %296 : vector<8x128xf32>
    %cst_107 = arith.constant 1.000000e+00 : f32
    %298 = vector.broadcast %cst_107 : f32 to vector<8x128xf32>
    %299 = arith.addf %297, %298 : vector<8x128xf32>
    %cst_108 = arith.constant 5.000000e-01 : f32
    %300 = vector.broadcast %cst_108 : f32 to vector<8x128xf32>
    %301 = arith.mulf %300, %299 : vector<8x128xf32>
    %302 = vector.extract_strided_slice %280 {offsets = [0, 256], sizes = [8, 128], strides = [1, 1]} : vector<8x384xf32> to vector<8x128xf32>
    %303 = vector.extract_strided_slice %281 {offsets = [0, 256], sizes = [8, 128], strides = [1, 1]} : vector<8x384xf32> to vector<8x128xf32>
    %304 = arith.addf %303, %14 : vector<8x128xf32>
    %305 = arith.mulf %291, %304 : vector<8x128xf32>
    %306 = arith.addf %302, %305 : vector<8x128xf32>
    %307 = math.tanh %306 : vector<8x128xf32>
    %cst_109 = arith.constant 1.000000e+00 : f32
    %308 = vector.broadcast %cst_109 : f32 to vector<8x128xf32>
    %309 = arith.subf %308, %301 : vector<8x128xf32>
    %310 = arith.mulf %309, %307 : vector<8x128xf32>
    %311 = arith.mulf %301, %269 : vector<8x128xf32>
    %312 = arith.addf %310, %311 : vector<8x128xf32>
    %313 = arith.index_cast %276 : i32 to index
    %c0_110 = arith.constant 0 : index
    %c0_111 = arith.constant 0 : index
    %314 = vector.load %arg6[%313, %c0_110, %c0_111] : memref<8x8x128xf32, #tpu.memory_space<vmem>>, vector<1x8x128xf32>
    %315 = vector.shape_cast %314 : vector<1x8x128xf32> to vector<8x128xf32>
    %316 = vector.shape_cast %312 : vector<8x128xf32> to vector<1x8x128xf32>
    tpu.vector_store %arg6[%313, %c0_110, %c0_111], %316 {strides = array<i32>} : memref<8x8x128xf32, #tpu.memory_space<vmem>>, vector<1x8x128xf32>,
    %c7_i32_112 = arith.constant 7 : i32
    %c0_i32_113 = arith.constant 0 : i32
    %317 = arith.cmpi eq, %arg0, %c0_i32_113 : i32
    %c7_i32_114 = arith.constant 7 : i32
    %318 = arith.subi %c7_i32_114, %c7_i32_112 : i32
    %319 = arith.select %317, %c7_i32_112, %318 : i32
    %c8_i32_115 = arith.constant 8 : i32
    %320 = arith.muli %319, %c8_i32_115 : i32
    %321 = tpu.assume_multiple %320, 8 : i32
    %322 = arith.index_cast %321 : i32 to index
    %c0_116 = arith.constant 0 : index
    %323 = vector.load %arg8[%322, %c0_116] : memref<64x384xf32, #tpu.memory_space<vmem>>, vector<8x384xf32>
    %cst_117 = arith.constant dense<0.000000e+00> : vector<8x384xf32>
    %324 = tpu.matmul %312, %10, %cst_117 {dimension_numbers = #tpu.dot_dimension_numbers<[1], [0], [0], [1], [0, 0, 1, 1], [], []>} : vector<8x128xf32>, vector<128x384xf32>, vector<8x384xf32> -> vector<8x384xf32>
    %325 = vector.extract_strided_slice %323 {offsets = [0, 0], sizes = [8, 128], strides = [1, 1]} : vector<8x384xf32> to vector<8x128xf32>
    %326 = vector.extract_strided_slice %324 {offsets = [0, 0], sizes = [8, 128], strides = [1, 1]} : vector<8x384xf32> to vector<8x128xf32>
    %327 = arith.addf %325, %326 : vector<8x128xf32>
    %cst_118 = arith.constant 5.000000e-01 : f32
    %328 = vector.broadcast %cst_118 : f32 to vector<8x128xf32>
    %329 = arith.mulf %328, %327 : vector<8x128xf32>
    %330 = math.tanh %329 : vector<8x128xf32>
    %cst_119 = arith.constant 1.000000e+00 : f32
    %331 = vector.broadcast %cst_119 : f32 to vector<8x128xf32>
    %332 = arith.addf %330, %331 : vector<8x128xf32>
    %cst_120 = arith.constant 5.000000e-01 : f32
    %333 = vector.broadcast %cst_120 : f32 to vector<8x128xf32>
    %334 = arith.mulf %333, %332 : vector<8x128xf32>
    %335 = vector.extract_strided_slice %323 {offsets = [0, 128], sizes = [8, 128], strides = [1, 1]} : vector<8x384xf32> to vector<8x128xf32>
    %336 = vector.extract_strided_slice %324 {offsets = [0, 128], sizes = [8, 128], strides = [1, 1]} : vector<8x384xf32> to vector<8x128xf32>
    %337 = arith.addf %335, %336 : vector<8x128xf32>
    %cst_121 = arith.constant 5.000000e-01 : f32
    %338 = vector.broadcast %cst_121 : f32 to vector<8x128xf32>
    %339 = arith.mulf %338, %337 : vector<8x128xf32>
    %340 = math.tanh %339 : vector<8x128xf32>
    %cst_122 = arith.constant 1.000000e+00 : f32
    %341 = vector.broadcast %cst_122 : f32 to vector<8x128xf32>
    %342 = arith.addf %340, %341 : vector<8x128xf32>
    %cst_123 = arith.constant 5.000000e-01 : f32
    %343 = vector.broadcast %cst_123 : f32 to vector<8x128xf32>
    %344 = arith.mulf %343, %342 : vector<8x128xf32>
    %345 = vector.extract_strided_slice %323 {offsets = [0, 256], sizes = [8, 128], strides = [1, 1]} : vector<8x384xf32> to vector<8x128xf32>
    %346 = vector.extract_strided_slice %324 {offsets = [0, 256], sizes = [8, 128], strides = [1, 1]} : vector<8x384xf32> to vector<8x128xf32>
    %347 = arith.addf %346, %14 : vector<8x128xf32>
    %348 = arith.mulf %334, %347 : vector<8x128xf32>
    %349 = arith.addf %345, %348 : vector<8x128xf32>
    %350 = math.tanh %349 : vector<8x128xf32>
    %cst_124 = arith.constant 1.000000e+00 : f32
    %351 = vector.broadcast %cst_124 : f32 to vector<8x128xf32>
    %352 = arith.subf %351, %344 : vector<8x128xf32>
    %353 = arith.mulf %352, %350 : vector<8x128xf32>
    %354 = arith.mulf %344, %312 : vector<8x128xf32>
    %355 = arith.addf %353, %354 : vector<8x128xf32>
    %356 = arith.index_cast %319 : i32 to index
    %c0_125 = arith.constant 0 : index
    %c0_126 = arith.constant 0 : index
    %357 = vector.load %arg6[%356, %c0_125, %c0_126] : memref<8x8x128xf32, #tpu.memory_space<vmem>>, vector<1x8x128xf32>
    %358 = vector.shape_cast %357 : vector<1x8x128xf32> to vector<8x128xf32>
    %359 = vector.shape_cast %355 : vector<8x128xf32> to vector<1x8x128xf32>
    tpu.vector_store %arg6[%356, %c0_125, %c0_126], %359 {strides = array<i32>} : memref<8x8x128xf32, #tpu.memory_space<vmem>>, vector<1x8x128xf32>,
    %c8_i32_127 = arith.constant 8 : i32
    %c0_128 = arith.constant 0 : index
    %c0_129 = arith.constant 0 : index
    %360 = vector.load %arg7[%c0_128, %c0_129] : memref<8x128xf32, #tpu.memory_space<vmem>>, vector<8x128xf32>
    tpu.vector_store %arg7[%c0_128, %c0_129], %355 {strides = array<i32>} : memref<8x128xf32, #tpu.memory_space<vmem>>, vector<8x128xf32>,
    return
  }
  func.func @transform_0(%arg0: i32) -> (i32, i32) {
    %c0_i32 = arith.constant 0 : i32
    %c0_i32_0 = arith.constant 0 : i32
    %c0_i32_1 = arith.constant 0 : i32
    return %c0_i32, %c0_i32_0 : i32, i32
  }
  func.func @transform_1(%arg0: i32) -> (i32, i32, i32) {
    %c0_i32 = arith.constant 0 : i32
    %c0_i32_0 = arith.constant 0 : i32
    %c0_i32_1 = arith.constant 0 : i32
    return %arg0, %c0_i32, %c0_i32_0 : i32, i32, i32
  }
  func.func @transform_2(%arg0: i32) -> (i32, i32, i32) {
    %c0_i32 = arith.constant 0 : i32
    %c0_i32_0 = arith.constant 0 : i32
    %c0_i32_1 = arith.constant 0 : i32
    return %arg0, %c0_i32, %c0_i32_0 : i32, i32, i32
  }
  func.func @transform_3(%arg0: i32) -> (i32, i32, i32) {
    %c0_i32 = arith.constant 0 : i32
    %c0_i32_0 = arith.constant 0 : i32
    %c0_i32_1 = arith.constant 0 : i32
    return %arg0, %c0_i32, %c0_i32_0 : i32, i32, i32
  }
  func.func @transform_4(%arg0: i32) -> (i32, i32, i32) {
    %c0_i32 = arith.constant 0 : i32
    %c0_i32_0 = arith.constant 0 : i32
    %c0_i32_1 = arith.constant 0 : i32
    return %arg0, %c0_i32, %c0_i32_0 : i32, i32, i32
  }
  func.func @transform_5(%arg0: i32) -> (i32, i32, i32) {
    %c0_i32 = arith.constant 0 : i32
    %c0_i32_0 = arith.constant 0 : i32
    %c0_i32_1 = arith.constant 0 : i32
    return %c0_i32, %c0_i32_0, %arg0 : i32, i32, i32
  }
  func.func @transform_6(%arg0: i32) -> (i32, i32) {
    %c0_i32 = arith.constant 0 : i32
    %c0_i32_0 = arith.constant 0 : i32
    return %c0_i32, %arg0 : i32, i32
  }
}

</mosaic_0001>

<llo_original>
// kernel: tpu_custom_call.1
$region0: #{tpu_custom_call.1}
  #allocation0 [shape = 'u32[]', space=smem, size = 0x4, offset = 0x4, fixed_abs, tag = 'smem constant byte address 0x4 - core index']
  #allocation1 [shape = 'u32[144,128]{1,0:T(1,128)}', space=vmem, size = 0x12000, scoped, tag = 'internal scratch']
  #allocation2 [shape = 'f32[64,384]{1,0:T(8,128)}', space=vmem, size = 0x18000, scoped, tag = 'scratch operand']
  %s0 = inlined_call_operand.hbm [shape: f32[64,128], index: 0, kind: input, shape index: {}]
  %s1 = inlined_call_operand.hbm [shape: f32[2,128,384], index: 1, kind: input, shape index: {}]
  %s2 = inlined_call_operand.hbm [shape: f32[2,128,384], index: 2, kind: input, shape index: {}]
  %s3 = inlined_call_operand.hbm [shape: f32[2,1,384], index: 3, kind: input, shape index: {}]
  %s4 = inlined_call_operand.vmem [shape: f32[2,1,128], index: 4, kind: input, shape index: {}]
  %s5 = inlined_call_operand.hbm [shape: f32[8,8,256], index: 5, kind: output, shape index: {0}]
  %s6 = inlined_call_operand.hbm [shape: f32[8,256], index: 6, kind: output, shape index: {1}]
  %7 = xla_tuple %s5, %s6
  %s8 = sld [smem:[#allocation0]]
  $region77: #{tpu_custom_call.1} parent=0
    _
  %s10 = ssub.s32 1, %s8
  %s11 = scalar_select 0, %s10, %s8
  $region1: #{tpu_custom_call.1} parent=0
    #allocation3 [shape = 'u8[32768]{0}', space=vmem, size = 0x8000, scoped, tag = 'input window, operand 0, single buffered']
    #allocation4 [shape = 's32[2]{0}', space=sflag, size = 0x8, scoped, tag = 'scoped memory for tpu_custom_call.1']
    #allocation5 [shape = 's32[2]{0}', space=sflag, size = 0x8, scoped, tag = 'scoped memory for tpu_custom_call.1']
    #allocation6 [shape = 'u8[393216]{0}', space=vmem, size = 0x60000, scoped, tag = 'input window, operand 1']
    #allocation7 [shape = 's32[2]{0}', space=sflag, size = 0x8, scoped, tag = 'scoped memory for tpu_custom_call.1']
    #allocation8 [shape = 'u8[393216]{0}', space=vmem, size = 0x60000, scoped, tag = 'input window, operand 2']
    #allocation9 [shape = 'u8[3072]{0}', space=vmem, size = 0xc00, scoped, tag = 'input window, operand 3']
    #allocation10 [shape = 's32[2]{0}', space=sflag, size = 0x8, scoped, tag = 'scoped memory for tpu_custom_call.1']
    #allocation11 [shape = 'u8[65536]{0}', space=vmem, size = 0x10000, scoped, tag = 'output window, operand 0']
    #allocation12 [shape = 'u8[8192]{0}', space=vmem, size = 0x2000, scoped, tag = 'output window, operand 1']
    #allocation13 [shape = 's32[2]{0}', space=sflag, size = 0x8, scoped, tag = 'scoped memory for tpu_custom_call.1']
    %12 = vsyncpa [#allocation4], 0
    %13 = vsyncpa [#allocation7], 0
    %s14 = scalar_lea.sflag [#allocation7], 1
    %15 = vsyncpa %s14, 0
    %16 = vsyncpa [#allocation10], 0
    %s17 = scalar_lea.sflag [#allocation10], 1
    %18 = vsyncpa %s17, 0
    %19 = vsyncpa [#allocation5], 0
    %s20 = scalar_lea.sflag [#allocation5], 1
    %21 = vsyncpa %s20, 0
    %22 = vsyncpa [#allocation13], 0
    %s23 = scalar_lea.sflag [#allocation13], 1
    %24 = vsyncpa %s23, 0
    loop: start=0, step=1, limit=4
    $region2: #{tpu_custom_call.1} parent=1 // loop_pre_header
      _
    $region3: #{tpu_custom_call.1} parent=1 // loop_header
      %s26 = sphi 0, %s30
      %p27 = scmp.ge.s32.totalorder %s26, 4
      %s34 = sphi 0, %s34
      %s36 = sphi 0, %s34
      %s37 = sphi 0, %s36
      %s51 = sphi 0, %s37
      %s57 = sphi 0, %s59
      %s60 = sphi 0, %s57
      %s61 = sphi 0, %s60
      %s77 = sphi 0, %s61
      %s83 = sphi 0, %s85
      %s86 = sphi 0, %s83
      %s87 = sphi 0, %s86
      %s103 = sphi 0, %s87
      %s109 = sphi 0, %s111
      %s112 = sphi 0, %s109
      %s113 = sphi 0, %s112
      %s129 = sphi 0, %s113
      %s135 = sphi 0, %s137
      %s138 = sphi 0, %s135
      %s139 = sphi 0, %s138
      %s155 = sphi 0, %s139
      %s161 = sphi 0, %s163
      %s164 = sphi 0, %s161
      %s165 = sphi 0, %s164
      %s181 = sphi 0, %s165
      %s187 = sphi 0, %s189
      %s190 = sphi 0, %s187
      %s191 = sphi 0, %s190
      %s207 = sphi 0, %s191
    $region4: #{tpu_custom_call.1} parent=1 // loop_header_branch
      %29 = sbr.rel (%p27) target = $region8
    $region5: #{tpu_custom_call.1} parent=1 // loop_body
      %s31 = ssub.s32 %s26, 1
      %s32 = ssub.s32 %s26, 2
      %s33 = sadd.s32 %s26, 1
      %s35 = sadd.s32 %s34, 1
      %p38 = scmp.eq.s32.totalorder %s26, 1
      %p39 = scmp.ne.s32.totalorder %s34, %s36
      %p40 = scmp.eq.s32.totalorder %s26, 0
      %p41 = por %p39, %p40
      %p42 = scmp.ne.s32.totalorder %s34, %s36
      %p43 = scmp.eq.s32.totalorder %s31, 1
      %p44 = por %p42, %p43
      %p45 = scmp.ne.s32.totalorder %s36, %s37
      %p46 = scmp.eq.s32.totalorder %s31, 0
      %p47 = por %p45, %p46
      %p48 = scmp.ne.s32.totalorder %s36, %s37
      %p49 = scmp.eq.s32.totalorder %s32, 1
      %p50 = por %p48, %p49
      %p52 = scmp.ne.s32.totalorder %s37, %s51
      %p53 = scmp.eq.s32.totalorder %s32, 0
      %p54 = por %p52, %p53
      %s55 = ssub.s32 %s26, %s33
      %p56 = scmp.eq.s32.totalorder %s55, 0
      %s58 = sadd.s32 %s57, 1
      %s59 = scalar_select %p56, %s57, %s58
      %p62 = pneg %p56
      %p63 = scmp.eq.s32.totalorder %s26, 1
      %p64 = por %p62, %p63
      %p65 = scmp.ne.s32.totalorder %s57, %s60
      %p66 = scmp.eq.s32.totalorder %s26, 0
      %p67 = por %p65, %p66
      %p68 = scmp.ne.s32.totalorder %s57, %s60
      %p69 = scmp.eq.s32.totalorder %s31, 1
      %p70 = por %p68, %p69
      %p71 = scmp.ne.s32.totalorder %s60, %s61
      %p72 = scmp.eq.s32.totalorder %s31, 0
      %p73 = por %p71, %p72
      %p74 = scmp.ne.s32.totalorder %s60, %s61
      %p75 = scmp.eq.s32.totalorder %s32, 1
      %p76 = por %p74, %p75
      %p78 = scmp.ne.s32.totalorder %s61, %s77
      %p79 = scmp.eq.s32.totalorder %s32, 0
      %p80 = por %p78, %p79
      %s81 = ssub.s32 %s26, %s33
      %p82 = scmp.eq.s32.totalorder %s81, 0
      %s84 = sadd.s32 %s83, 1
      %s85 = scalar_select %p82, %s83, %s84
      %p88 = pneg %p82
      %p89 = scmp.eq.s32.totalorder %s26, 1
      %p90 = por %p88, %p89
      %p91 = scmp.ne.s32.totalorder %s83, %s86
      %p92 = scmp.eq.s32.totalorder %s26, 0
      %p93 = por %p91, %p92
      %p94 = scmp.ne.s32.totalorder %s83, %s86
      %p95 = scmp.eq.s32.totalorder %s31, 1
      %p96 = por %p94, %p95
      %p97 = scmp.ne.s32.totalorder %s86, %s87
      %p98 = scmp.eq.s32.totalorder %s31, 0
      %p99 = por %p97, %p98
      %p100 = scmp.ne.s32.totalorder %s86, %s87
      %p101 = scmp.eq.s32.totalorder %s32, 1
      %p102 = por %p100, %p101
      %p104 = scmp.ne.s32.totalorder %s87, %s103
      %p105 = scmp.eq.s32.totalorder %s32, 0
      %p106 = por %p104, %p105
      %s107 = ssub.s32 %s26, %s33
      %p108 = scmp.eq.s32.totalorder %s107, 0
      %s110 = sadd.s32 %s109, 1
      %s111 = scalar_select %p108, %s109, %s110
      %p114 = pneg %p108
      %p115 = scmp.eq.s32.totalorder %s26, 1
      %p116 = por %p114, %p115
      %p117 = scmp.ne.s32.totalorder %s109, %s112
      %p118 = scmp.eq.s32.totalorder %s26, 0
      %p119 = por %p117, %p118
      %p120 = scmp.ne.s32.totalorder %s109, %s112
      %p121 = scmp.eq.s32.totalorder %s31, 1
      %p122 = por %p120, %p121
      %p123 = scmp.ne.s32.totalorder %s112, %s113
      %p124 = scmp.eq.s32.totalorder %s31, 0
      %p125 = por %p123, %p124
      %p126 = scmp.ne.s32.totalorder %s112, %s113
      %p127 = scmp.eq.s32.totalorder %s32, 1
      %p128 = por %p126, %p127
      %p130 = scmp.ne.s32.totalorder %s113, %s129
      %p131 = scmp.eq.s32.totalorder %s32, 0
      %p132 = por %p130, %p131
      %s133 = ssub.s32 %s26, %s33
      %p134 = scmp.eq.s32.totalorder %s133, 0
      %s136 = sadd.s32 %s135, 1
      %s137 = scalar_select %p134, %s135, %s136
      %p140 = pneg %p134
      %p141 = scmp.eq.s32.totalorder %s26, 1
      %p142 = por %p140, %p141
      %p143 = scmp.ne.s32.totalorder %s135, %s138
      %p144 = scmp.eq.s32.totalorder %s26, 0
      %p145 = por %p143, %p144
      %p146 = scmp.ne.s32.totalorder %s135, %s138
      %p147 = scmp.eq.s32.totalorder %s31, 1
      %p148 = por %p146, %p147
      %p149 = scmp.ne.s32.totalorder %s138, %s139
      %p150 = scmp.eq.s32.totalorder %s31, 0
      %p151 = por %p149, %p150
      %p152 = scmp.ne.s32.totalorder %s138, %s139
      %p153 = scmp.eq.s32.totalorder %s32, 1
      %p154 = por %p152, %p153
      %p156 = scmp.ne.s32.totalorder %s139, %s155
      %p157 = scmp.eq.s32.totalorder %s32, 0
      %p158 = por %p156, %p157
      %s159 = ssub.s32 %s26, %s33
      %p160 = scmp.eq.s32.totalorder %s159, 0
      %s162 = sadd.s32 %s161, 1
      %s163 = scalar_select %p160, %s161, %s162
      %p166 = pneg %p160
      %p167 = scmp.eq.s32.totalorder %s26, 1
      %p168 = por %p166, %p167
      %p169 = scmp.ne.s32.totalorder %s161, %s164
      %p170 = scmp.eq.s32.totalorder %s26, 0
      %p171 = por %p169, %p170
      %p172 = scmp.ne.s32.totalorder %s161, %s164
      %p173 = scmp.eq.s32.totalorder %s31, 1
      %p174 = por %p172, %p173
      %p175 = scmp.ne.s32.totalorder %s164, %s165
      %p176 = scmp.eq.s32.totalorder %s31, 0
      %p177 = por %p175, %p176
      %p178 = scmp.ne.s32.totalorder %s164, %s165
      %p179 = scmp.eq.s32.totalorder %s32, 1
      %p180 = por %p178, %p179
      %p182 = scmp.ne.s32.totalorder %s165, %s181
      %p183 = scmp.eq.s32.totalorder %s32, 0
      %p184 = por %p182, %p183
      %s185 = ssub.s32 %s26, %s33
      %p186 = scmp.eq.s32.totalorder %s185, 0
      %s188 = sadd.s32 %s187, 1
      %s189 = scalar_select %p186, %s187, %s188
      %p192 = pneg %p186
      %p193 = scmp.eq.s32.totalorder %s26, 1
      %p194 = por %p192, %p193
      %p195 = scmp.ne.s32.totalorder %s187, %s190
      %p196 = scmp.eq.s32.totalorder %s26, 0
      %p197 = por %p195, %p196
      %p198 = scmp.ne.s32.totalorder %s187, %s190
      %p199 = scmp.eq.s32.totalorder %s31, 1
      %p200 = por %p198, %p199
      %p201 = scmp.ne.s32.totalorder %s190, %s191
      %p202 = scmp.eq.s32.totalorder %s31, 0
      %p203 = por %p201, %p202
      %p204 = scmp.ne.s32.totalorder %s190, %s191
      %p205 = scmp.eq.s32.totalorder %s32, 1
      %p206 = por %p204, %p205
      %p208 = scmp.ne.s32.totalorder %s191, %s207
      %p209 = scmp.eq.s32.totalorder %s32, 0
      %p210 = por %p208, %p209
      %p211 = scmp.le.s32.totalorder 1, %s26
      %p212 = scmp.lt.s32.totalorder %s26, 3
      %p213 = pnand %p211, %p212
      %p214 = pneg %p213
      // Predicated region
      $region9: #{tpu_custom_call.1} parent=5 // pred_check
        _
      $region10: #{tpu_custom_call.1} parent=5 // pred_check_branch
        %216 = sbr.rel (%p213) target = $region12
      $region11: #{tpu_custom_call.1} parent=5 // pred_region
        %s217 = ssub.s32 %s26, 1
        // Predicated region
        $region13: #{tpu_custom_call.1} parent=11 // pred_check
          %p218 = pneg %p47
        $region14: #{tpu_custom_call.1} parent=11 // pred_check_branch
          %220 = sbr.rel (%p218) target = $region16
        $region15: #{tpu_custom_call.1} parent=11 // pred_region
          %s222 = ssub.s32 1024, 1024
          %223 = vsyncadd [#allocation4], %s222
          %s224 = sshll.u32 [#allocation3], 4
          %s225 = int_to_ptr.vmem [resolvable:$true] %s224
          %230 = dma.hbm_to_vmem [thread:$0]  %s0, 1024, %s225, [#allocation4], 128, 128, 8
        $region16: #{tpu_custom_call.1} parent=11 // pred_fallthru
          _
      $region12: #{tpu_custom_call.1} parent=5 // pred_fallthru
        _
      %p231 = scmp.lt.s32.totalorder %s26, 2
      // Predicated region
      $region17: #{tpu_custom_call.1} parent=5 // pred_check
        %p232 = pneg %p231
      $region18: #{tpu_custom_call.1} parent=5 // pred_check_branch
        %234 = sbr.rel (%p232) target = $region20
      $region19: #{tpu_custom_call.1} parent=5 // pred_region
        // Predicated region
        $region21: #{tpu_custom_call.1} parent=19 // pred_check
          %p235 = pneg %p67
        $region22: #{tpu_custom_call.1} parent=19 // pred_check_branch
          %237 = sbr.rel (%p235) target = $region24
        $region23: #{tpu_custom_call.1} parent=19 // pred_region
          %s238 = sand.u32 %s26, 1
          %s239 = scalar_lea.sflag [#allocation7], %s238
          %s240 = sand.u32 %s57, 1
          %s241 = smul.addr %s240, 384
          %s242 = scalar_lea.vmem [#allocation6], %s241
          %s244 = ssub.s32 6144, 6144
          %245 = vsyncadd %s239, %s244
          %s246 = smul.addr %s26, 48
          %s247 = smul.addr %s246, 128
          %s248 = scalar_lea.hbm %s1, %s247
          %s249 = sshll.u32 %s242, 4
          %s250 = int_to_ptr.vmem [resolvable:$true] %s249
          %255 = dma.hbm_to_vmem [thread:$0]  %s248, 6144, %s250, %s239, 384, 384, 24
        $region24: #{tpu_custom_call.1} parent=19 // pred_fallthru
          _
        // Predicated region
        $region25: #{tpu_custom_call.1} parent=19 // pred_check
          %p256 = pneg %p93
        $region26: #{tpu_custom_call.1} parent=19 // pred_check_branch
          %258 = sbr.rel (%p256) target = $region28
        $region27: #{tpu_custom_call.1} parent=19 // pred_region
          %s259 = sand.u32 %s26, 1
          %s260 = scalar_lea.sflag [#allocation7], %s259
          %s261 = sand.u32 %s83, 1
          %s262 = smul.addr %s261, 384
          %s263 = scalar_lea.vmem [#allocation8], %s262
          %s265 = ssub.s32 6144, 6144
          %266 = vsyncadd %s260, %s265
          %s267 = smul.addr %s26, 48
          %s268 = smul.addr %s267, 128
          %s269 = scalar_lea.hbm %s2, %s268
          %s270 = sshll.u32 %s263, 4
          %s271 = int_to_ptr.vmem [resolvable:$true] %s270
          %276 = dma.hbm_to_vmem [thread:$0]  %s269, 6144, %s271, %s260, 384, 384, 24
        $region28: #{tpu_custom_call.1} parent=19 // pred_fallthru
          _
        // Predicated region
        $region29: #{tpu_custom_call.1} parent=19 // pred_check
          %p277 = pneg %p119
        $region30: #{tpu_custom_call.1} parent=19 // pred_check_branch
          %279 = sbr.rel (%p277) target = $region32
        $region31: #{tpu_custom_call.1} parent=19 // pred_region
          %s280 = sand.u32 %s109, 1
          %s281 = scalar_lea.sflag [#allocation10], %s280
          %s282 = sand.u32 %s109, 1
          %s283 = smul.addr %s282, 3
          %s284 = scalar_lea.vmem [#allocation9], %s283
          %s286 = ssub.s32 48, 48
          %287 = vsyncadd %s281, %s286
          %s288 = smul.addr %s26, 3
          %s289 = smul.addr %s288, 16
          %s290 = scalar_lea.hbm %s3, %s289
          %s292 = sshll.u32 %s284, 4
          %s293 = int_to_ptr.vmem [resolvable:$true] %s292
          %295 = dma.hbm_to_vmem [thread:$0]  %s290, 48, %s293, %s281
        $region32: #{tpu_custom_call.1} parent=19 // pred_fallthru
          _
        // Predicated region
        $region33: #{tpu_custom_call.1} parent=19 // pred_check
          %p296 = pneg %p145
        $region34: #{tpu_custom_call.1} parent=19 // pred_check_branch
          %298 = sbr.rel (%p296) target = $region36
        $region35: #{tpu_custom_call.1} parent=19 // pred_region
          %p299 = scmp.lt.s32.totalorder %s26, 1
          %s300 = scalar_select %p299, %s26, 1
          %s301 = scalar_lea.vmem %s4, %s300
        $region36: #{tpu_custom_call.1} parent=19 // pred_fallthru
          _
      $region20: #{tpu_custom_call.1} parent=5 // pred_fallthru
        _
      %p302 = scmp.le.s32.totalorder 1, %s26
      %p303 = scmp.lt.s32.totalorder %s26, 3
      %p304 = pnand %p302, %p303
      %p305 = pneg %p304
      // Predicated region
      $region37: #{tpu_custom_call.1} parent=5 // pred_check
        _
      $region38: #{tpu_custom_call.1} parent=5 // pred_check_branch
        %307 = sbr.rel (%p304) target = $region40
      $region39: #{tpu_custom_call.1} parent=5 // pred_region
        %s308 = ssub.s32 %s26, 1
        // Predicated region
        $region41: #{tpu_custom_call.1} parent=39 // pred_check
          %p309 = pneg %p47
        $region42: #{tpu_custom_call.1} parent=39 // pred_check_branch
          %311 = sbr.rel (%p309) target = $region44
        $region43: #{tpu_custom_call.1} parent=39 // pred_region
          %312 = dma.done [#allocation4], 1024
        $region44: #{tpu_custom_call.1} parent=39 // pred_fallthru
          _
        %s313 = sand.u32 %s31, 1
        %s314 = scalar_lea.sflag [#allocation7], %s313
        %s315 = sand.u32 %s60, 1
        %s316 = smul.addr %s315, 384
        %s317 = scalar_lea.vmem [#allocation6], %s316
        // Predicated region
        $region45: #{tpu_custom_call.1} parent=39 // pred_check
          %p318 = pneg %p73
        $region46: #{tpu_custom_call.1} parent=39 // pred_check_branch
          %320 = sbr.rel (%p318) target = $region48
        $region47: #{tpu_custom_call.1} parent=39 // pred_region
          %321 = dma.done %s314, 6144
        $region48: #{tpu_custom_call.1} parent=39 // pred_fallthru
          _
        %s322 = sand.u32 %s31, 1
        %s323 = scalar_lea.sflag [#allocation7], %s322
        %s324 = sand.u32 %s86, 1
        %s325 = smul.addr %s324, 384
        %s326 = scalar_lea.vmem [#allocation8], %s325
        // Predicated region
        $region49: #{tpu_custom_call.1} parent=39 // pred_check
          %p327 = pneg %p99
        $region50: #{tpu_custom_call.1} parent=39 // pred_check_branch
          %329 = sbr.rel (%p327) target = $region52
        $region51: #{tpu_custom_call.1} parent=39 // pred_region
          %330 = dma.done %s323, 6144
        $region52: #{tpu_custom_call.1} parent=39 // pred_fallthru
          _
        %s331 = sand.u32 %s112, 1
        %s332 = scalar_lea.sflag [#allocation10], %s331
        %s333 = sand.u32 %s112, 1
        %s334 = smul.addr %s333, 3
        %s335 = scalar_lea.vmem [#allocation9], %s334
        // Predicated region
        $region53: #{tpu_custom_call.1} parent=39 // pred_check
          %p336 = pneg %p125
        $region54: #{tpu_custom_call.1} parent=39 // pred_check_branch
          %338 = sbr.rel (%p336) target = $region56
        $region55: #{tpu_custom_call.1} parent=39 // pred_region
          %339 = dma.done %s332, 48
        $region56: #{tpu_custom_call.1} parent=39 // pred_fallthru
          _
        %p340 = pneg %p47
        %p341 = pneg %p44
        %s342 = sand.u32 %s31, 1
        %s343 = scalar_lea.sflag [#allocation7], %s342
        %s344 = sand.u32 %s60, 1
        %s345 = smul.addr %s344, 384
        %s346 = scalar_lea.vmem [#allocation6], %s345
        %p347 = pneg %p73
        %p348 = pneg %p70
        %s349 = sand.u32 %s31, 1
        %s350 = scalar_lea.sflag [#allocation7], %s349
        %s351 = sand.u32 %s86, 1
        %s352 = smul.addr %s351, 384
        %s353 = scalar_lea.vmem [#allocation8], %s352
        %p354 = pneg %p99
        %p355 = pneg %p96
        %s356 = sand.u32 %s112, 1
        %s357 = scalar_lea.sflag [#allocation10], %s356
        %s358 = sand.u32 %s112, 1
        %s359 = smul.addr %s358, 3
        %s360 = scalar_lea.vmem [#allocation9], %s359
        %p361 = pneg %p125
        %p362 = pneg %p122
        %p363 = scmp.lt.s32.totalorder %s31, 1
        %s364 = scalar_select %p363, %s31, 1
        %s365 = scalar_lea.vmem %s4, %s364
        %p366 = pneg %p151
        %p367 = pneg %p148
        %p368 = pneg %p177
        %p369 = pneg %p174
        %s370 = sand.u32 %s164, 1
        %s371 = scalar_lea.sflag [#allocation5], %s370
        %s372 = sand.u32 %s164, 1
        %s373 = smul.addr %s372, 64
        %s374 = scalar_lea.vmem [#allocation11], %s373
        %p375 = pneg %p203
        %p376 = pneg %p200
        %s377 = sand.u32 %s190, 1
        %s378 = scalar_lea.sflag [#allocation13], %s377
        %s379 = sand.u32 %s190, 1
        %s380 = smul.addr %s379, 8
        %s381 = scalar_lea.vmem [#allocation12], %s380
        %p382 = scmp.lt.s32.totalorder %s31, 1
        %s383 = scalar_select %p382, %s31, 1
        %s384 = scalar_lea.vmem %s4, %s383
        %v385 = vld [vmem:[#allocation3] sm:$0xff]
        %v386 = vld [vmem:[#allocation3 + $0x8] sm:$0xff]
        %v387 = vld [vmem:[#allocation3 + $0x10] sm:$0xff]
        %v388 = vld [vmem:[#allocation3 + $0x18] sm:$0xff]
        %v389 = vld [vmem:[#allocation3 + $0x20] sm:$0xff]
        %v390 = vld [vmem:[#allocation3 + $0x28] sm:$0xff]
        %v391 = vld [vmem:[#allocation3 + $0x30] sm:$0xff]
        %v392 = vld [vmem:[#allocation3 + $0x38] sm:$0xff]
        %v393 = vld [vmem:[%s317] sm:$0xff]
        %v394 = vld [vmem:[%s317 + $0x8] sm:$0xff]
        %v395 = vld [vmem:[%s317 + $0x10] sm:$0xff]
        %v396 = vld [vmem:[%s317 + $0x18] sm:$0xff]
        %v397 = vld [vmem:[%s317 + $0x20] sm:$0xff]
        %v398 = vld [vmem:[%s317 + $0x28] sm:$0xff]
        %v399 = vld [vmem:[%s317 + $0x30] sm:$0xff]
        %v400 = vld [vmem:[%s317 + $0x38] sm:$0xff]
        %v401 = vld [vmem:[%s317 + $0x40] sm:$0xff]
        %v402 = vld [vmem:[%s317 + $0x48] sm:$0xff]
        %v403 = vld [vmem:[%s317 + $0x50] sm:$0xff]
        %v404 = vld [vmem:[%s317 + $0x58] sm:$0xff]
        %v405 = vld [vmem:[%s317 + $0x60] sm:$0xff]
        %v406 = vld [vmem:[%s317 + $0x68] sm:$0xff]
        %v407 = vld [vmem:[%s317 + $0x70] sm:$0xff]
        %v408 = vld [vmem:[%s317 + $0x78] sm:$0xff]
        %v409 = vld [vmem:[%s317 + $0x80] sm:$0xff]
        %v410 = vld [vmem:[%s317 + $0x88] sm:$0xff]
        %v411 = vld [vmem:[%s317 + $0x90] sm:$0xff]
        %v412 = vld [vmem:[%s317 + $0x98] sm:$0xff]
        %v413 = vld [vmem:[%s317 + $0xa0] sm:$0xff]
        %v414 = vld [vmem:[%s317 + $0xa8] sm:$0xff]
        %v415 = vld [vmem:[%s317 + $0xb0] sm:$0xff]
        %v416 = vld [vmem:[%s317 + $0xb8] sm:$0xff]
        %v417 = vld [vmem:[%s317 + $0xc0] sm:$0xff]
        %v418 = vld [vmem:[%s317 + $0xc8] sm:$0xff]
        %v419 = vld [vmem:[%s317 + $0xd0] sm:$0xff]
        %v420 = vld [vmem:[%s317 + $0xd8] sm:$0xff]
        %v421 = vld [vmem:[%s317 + $0xe0] sm:$0xff]
        %v422 = vld [vmem:[%s317 + $0xe8] sm:$0xff]
        %v423 = vld [vmem:[%s317 + $0xf0] sm:$0xff]
        %v424 = vld [vmem:[%s317 + $0xf8] sm:$0xff]
        %v425 = vld [vmem:[%s317 + $0x100] sm:$0xff]
        %v426 = vld [vmem:[%s317 + $0x108] sm:$0xff]
        %v427 = vld [vmem:[%s317 + $0x110] sm:$0xff]
        %v428 = vld [vmem:[%s317 + $0x118] sm:$0xff]
        %v429 = vld [vmem:[%s317 + $0x120] sm:$0xff]
        %v430 = vld [vmem:[%s317 + $0x128] sm:$0xff]
        %v431 = vld [vmem:[%s317 + $0x130] sm:$0xff]
        %v432 = vld [vmem:[%s317 + $0x138] sm:$0xff]
        %v433 = vld [vmem:[%s317 + $0x140] sm:$0xff]
        %v434 = vld [vmem:[%s317 + $0x148] sm:$0xff]
        %v435 = vld [vmem:[%s317 + $0x150] sm:$0xff]
        %v436 = vld [vmem:[%s317 + $0x158] sm:$0xff]
        %v437 = vld [vmem:[%s317 + $0x160] sm:$0xff]
        %v438 = vld [vmem:[%s317 + $0x168] sm:$0xff]
        %v439 = vld [vmem:[%s317 + $0x170] sm:$0xff]
        %v440 = vld [vmem:[%s317 + $0x178] sm:$0xff]
        %v441 = vld [vmem:[%s335] sm:$0x7]
        %v443 = vlaneseq
        %v444 = vshrl.u32 %v443, 7
        %v445 = vsub.s32 0, %v444
        %v446 = vrot.slane %v441, %v445
        %v447 = vlaneseq
        %v448 = vshrl.u32 %v447, 7
        %v449 = vsub.s32 1, %v448
        %v450 = vrot.slane %v441, %v449
        %v451 = vlaneseq
        %v452 = vshrl.u32 %v451, 7
        %v453 = vsub.s32 2, %v452
        %v454 = vrot.slane %v441, %v453
        %458 = vmatprep.subr.mxu0 %v439
        %459 = vmatpush1.msra.mxu0 %v438
        %460 = vmatprep.subr.mxu0 %v436
        %461 = vmatpush1.msra.mxu0 %v435
        %462 = vmatprep.subr.mxu0 %v433
        %463 = vmatpush1.msra.mxu0 %v432
        %464 = vmatprep.subr.mxu0 %v430
        %465 = vmatpush1.msra.mxu0 %v429
        %466 = vmatprep.subr.mxu0 %v427
        %467 = vmatpush1.msra.mxu0 %v426
        %468 = vmatprep.subr.mxu0 %v424
        %469 = vmatpush1.msra.mxu0 %v423
        %470 = vmatprep.subr.mxu0 %v421
        %471 = vmatpush1.msra.mxu0 %v420
        %472 = vmatprep.subr.mxu0 %v418
        %473 = vmatpush1.msra.mxu0 %v417
        %474 = vmatprep.subr.mxu0 %v415
        %475 = vmatpush1.msra.mxu0 %v414
        %476 = vmatprep.subr.mxu0 %v412
        %477 = vmatpush1.msra.mxu0 %v411
        %478 = vmatprep.subr.mxu0 %v409
        %479 = vmatpush1.msra.mxu0 %v408
        %480 = vmatprep.subr.mxu0 %v406
        %481 = vmatpush1.msra.mxu0 %v405
        %482 = vmatprep.subr.mxu0 %v403
        %483 = vmatpush1.msra.mxu0 %v402
        %484 = vmatprep.subr.mxu0 %v400
        %485 = vmatpush1.msra.mxu0 %v399
        %486 = vmatprep.subr.mxu0 %v397
        %487 = vmatpush1.msra.mxu0 %v396
        %488 = vmatprep.subr.mxu0 %v394
        %489 = vmatpush1.msra.mxu0 %v393
        %490 = vmatprep.subr.mxu0 0.0
        %491 = vmatpush2.msra.mxu0 0.0
        %492 = vmatprep.subr.mxu0 0.0
        %493 = vmatpush2.msra.mxu0 0.0
        %494 = vmatprep.subr.mxu0 0.0
        %495 = vmatpush2.msra.mxu0 0.0
        %496 = vmatprep.subr.mxu0 0.0
        %497 = vmatpush2.msra.mxu0 0.0
        %498 = vmatprep.subr.mxu0 0.0
        %499 = vmatpush2.msra.mxu0 0.0
        %500 = vmatprep.subr.mxu0 0.0
        %501 = vmatpush2.msra.mxu0 0.0
        %502 = vmatprep.subr.mxu0 0.0
        %503 = vmatpush2.msra.mxu0 0.0
        %504 = vmatprep.subr.mxu0 0.0
        %505 = vmatpush2.msra.mxu0 0.0
        %506 = vmatprep.subr.mxu0 0.0
        %507 = vmatpush2.msra.mxu0 0.0
        %508 = vmatprep.subr.mxu0 0.0
        %509 = vmatpush2.msra.mxu0 0.0
        %510 = vmatprep.subr.mxu0 0.0
        %511 = vmatpush2.msra.mxu0 0.0
        %512 = vmatprep.subr.mxu0 0.0
        %513 = vmatpush2.msra.mxu0 0.0
        %514 = vmatprep.subr.mxu0 0.0
        %515 = vmatpush2.msra.mxu0 0.0
        %516 = vmatprep.subr.mxu0 0.0
        %517 = vmatpush2.msra.mxu0 0.0
        %518 = vmatprep.subr.mxu0 0.0
        %519 = vmatpush2.msra.mxu0 0.0
        %520 = vmatprep.subr.mxu0 0.0
        %521 = vmatpush2.msra.mxu0 0.0
        %522 = vmatprep.mubr.f32.mxu0 0.0
        %523 = vmatmul.mubr.f32.gmra.mxu0 %v385
        %v524 = vpop.f32.mrf.mxu0
        %v525 = vadd.f32 %v446, %v524
        %v526 = vpop.f32.mrf.mxu0
        %v527 = vadd.f32 %v450, %v526
        %528 = vmatprep.mubr.f32.mxu0 0.0
        %529 = vmatmul.mubr.f32.gmra.mxu0 %v386
        %v530 = vpop.f32.mrf.mxu0
        %v531 = vadd.f32 %v446, %v530
        %v532 = vpop.f32.mrf.mxu0
        %v533 = vadd.f32 %v450, %v532
        %534 = vmatprep.mubr.f32.mxu0 0.0
        %535 = vmatmul.mubr.f32.gmra.mxu0 %v387
        %v536 = vpop.f32.mrf.mxu0
        %v537 = vadd.f32 %v446, %v536
        %v538 = vpop.f32.mrf.mxu0
        %v539 = vadd.f32 %v450, %v538
        %540 = vmatprep.mubr.f32.mxu0 0.0
        %541 = vmatmul.mubr.f32.gmra.mxu0 %v388
        %v542 = vpop.f32.mrf.mxu0
        %v543 = vadd.f32 %v446, %v542
        %v544 = vpop.f32.mrf.mxu0
        %v545 = vadd.f32 %v450, %v544
        %546 = vmatprep.mubr.f32.mxu0 0.0
        %547 = vmatmul.mubr.f32.gmra.mxu0 %v389
        %v548 = vpop.f32.mrf.mxu0
        %v549 = vadd.f32 %v446, %v548
        %v550 = vpop.f32.mrf.mxu0
        %v551 = vadd.f32 %v450, %v550
        %552 = vmatprep.mubr.f32.mxu0 0.0
        %553 = vmatmul.mubr.f32.gmra.mxu0 %v390
        %v554 = vpop.f32.mrf.mxu0
        %v555 = vadd.f32 %v446, %v554
        %v556 = vpop.f32.mrf.mxu0
        %v557 = vadd.f32 %v450, %v556
        %558 = vmatprep.mubr.f32.mxu0 0.0
        %559 = vmatmul.mubr.f32.gmra.mxu0 %v391
        %v560 = vpop.f32.mrf.mxu0
        %v561 = vadd.f32 %v446, %v560
        %v562 = vpop.f32.mrf.mxu0
        %v563 = vadd.f32 %v450, %v562
        %564 = vmatprep.mubr.f32.mxu0 0.0
        %565 = vmatmul.mubr.f32.gmra.mxu0 %v392
        %v566 = vpop.f32.mrf.mxu0
        %v567 = vadd.f32 %v446, %v566
        %v568 = vpop.f32.mrf.mxu0
        %v569 = vadd.f32 %v450, %v568
        %570 = vdwg.mxu0
        %571 = vmatprep.subr.mxu0 0.0
        %572 = vmatpush1.msra.mxu0 %v440
        %573 = vmatprep.subr.mxu0 0.0
        %574 = vmatpush1.msra.mxu0 %v437
        %575 = vmatprep.subr.mxu0 0.0
        %576 = vmatpush1.msra.mxu0 %v434
        %577 = vmatprep.subr.mxu0 0.0
        %578 = vmatpush1.msra.mxu0 %v431
        %579 = vmatprep.subr.mxu0 0.0
        %580 = vmatpush1.msra.mxu0 %v428
        %581 = vmatprep.subr.mxu0 0.0
        %582 = vmatpush1.msra.mxu0 %v425
        %583 = vmatprep.subr.mxu0 0.0
        %584 = vmatpush1.msra.mxu0 %v422
        %585 = vmatprep.subr.mxu0 0.0
        %586 = vmatpush1.msra.mxu0 %v419
        %587 = vmatprep.subr.mxu0 0.0
        %588 = vmatpush1.msra.mxu0 %v416
        %589 = vmatprep.subr.mxu0 0.0
        %590 = vmatpush1.msra.mxu0 %v413
        %591 = vmatprep.subr.mxu0 0.0
        %592 = vmatpush1.msra.mxu0 %v410
        %593 = vmatprep.subr.mxu0 0.0
        %594 = vmatpush1.msra.mxu0 %v407
        %595 = vmatprep.subr.mxu0 0.0
        %596 = vmatpush1.msra.mxu0 %v404
        %597 = vmatprep.subr.mxu0 0.0
        %598 = vmatpush1.msra.mxu0 %v401
        %599 = vmatprep.subr.mxu0 0.0
        %600 = vmatpush1.msra.mxu0 %v398
        %601 = vmatprep.subr.mxu0 0.0
        %602 = vmatpush1.msra.mxu0 %v395
        %603 = vmatprep.subr.mxu0 0.0
        %604 = vmatpush2.msra.mxu0 0.0
        %605 = vmatprep.subr.mxu0 0.0
        %606 = vmatpush2.msra.mxu0 0.0
        %607 = vmatprep.subr.mxu0 0.0
        %608 = vmatpush2.msra.mxu0 0.0
        %609 = vmatprep.subr.mxu0 0.0
        %610 = vmatpush2.msra.mxu0 0.0
        %611 = vmatprep.subr.mxu0 0.0
        %612 = vmatpush2.msra.mxu0 0.0
        %613 = vmatprep.subr.mxu0 0.0
        %614 = vmatpush2.msra.mxu0 0.0
        %615 = vmatprep.subr.mxu0 0.0
        %616 = vmatpush2.msra.mxu0 0.0
        %617 = vmatprep.subr.mxu0 0.0
        %618 = vmatpush2.msra.mxu0 0.0
        %619 = vmatprep.subr.mxu0 0.0
        %620 = vmatpush2.msra.mxu0 0.0
        %621 = vmatprep.subr.mxu0 0.0
        %622 = vmatpush2.msra.mxu0 0.0
        %623 = vmatprep.subr.mxu0 0.0
        %624 = vmatpush2.msra.mxu0 0.0
        %625 = vmatprep.subr.mxu0 0.0
        %626 = vmatpush2.msra.mxu0 0.0
        %627 = vmatprep.subr.mxu0 0.0
        %628 = vmatpush2.msra.mxu0 0.0
        %629 = vmatprep.subr.mxu0 0.0
        %630 = vmatpush2.msra.mxu0 0.0
        %631 = vmatprep.subr.mxu0 0.0
        %632 = vmatpush2.msra.mxu0 0.0
        %633 = vmatprep.subr.mxu0 0.0
        %634 = vmatpush2.msra.mxu0 0.0
        %635 = vmatprep.mubr.f32.mxu0 0.0
        %636 = vmatmul.mubr.f32.gmra.mxu0 %v385
        %v637 = vpop.f32.mrf.mxu0
        %v638 = vadd.f32 %v454, %v637
        %v639 = vpop.f32.mrf.mxu0
        %640 = vmatprep.mubr.f32.mxu0 0.0
        %641 = vmatmul.mubr.f32.gmra.mxu0 %v386
        %v642 = vpop.f32.mrf.mxu0
        %v643 = vadd.f32 %v454, %v642
        %v644 = vpop.f32.mrf.mxu0
        %645 = vmatprep.mubr.f32.mxu0 0.0
        %646 = vmatmul.mubr.f32.gmra.mxu0 %v387
        %v647 = vpop.f32.mrf.mxu0
        %v648 = vadd.f32 %v454, %v647
        %v649 = vpop.f32.mrf.mxu0
        %650 = vmatprep.mubr.f32.mxu0 0.0
        %651 = vmatmul.mubr.f32.gmra.mxu0 %v388
        %v652 = vpop.f32.mrf.mxu0
        %v653 = vadd.f32 %v454, %v652
        %v654 = vpop.f32.mrf.mxu0
        %655 = vmatprep.mubr.f32.mxu0 0.0
        %656 = vmatmul.mubr.f32.gmra.mxu0 %v389
        %v657 = vpop.f32.mrf.mxu0
        %v658 = vadd.f32 %v454, %v657
        %v659 = vpop.f32.mrf.mxu0
        %660 = vmatprep.mubr.f32.mxu0 0.0
        %661 = vmatmul.mubr.f32.gmra.mxu0 %v390
        %v662 = vpop.f32.mrf.mxu0
        %v663 = vadd.f32 %v454, %v662
        %v664 = vpop.f32.mrf.mxu0
        %665 = vmatprep.mubr.f32.mxu0 0.0
        %666 = vmatmul.mubr.f32.gmra.mxu0 %v391
        %v667 = vpop.f32.mrf.mxu0
        %v668 = vadd.f32 %v454, %v667
        %v669 = vpop.f32.mrf.mxu0
        %670 = vmatprep.mubr.f32.mxu0 0.0
        %671 = vmatmul.mubr.f32.gmra.mxu0 %v392
        %v672 = vpop.f32.mrf.mxu0
        %v673 = vadd.f32 %v454, %v672
        %v674 = vpop.f32.mrf.mxu0
        %675 = vdwg.mxu0
        %676 = vst [vmem:[#allocation2] sm:$0xff] %v525
        %677 = vst [vmem:[#allocation2 + $0x8] sm:$0xff] %v527
        %678 = vst [vmem:[#allocation2 + $0x10] sm:$0xff] %v638
        %679 = vst [vmem:[#allocation2 + $0x18] sm:$0xff] %v531
        %680 = vst [vmem:[#allocation2 + $0x20] sm:$0xff] %v533
        %681 = vst [vmem:[#allocation2 + $0x28] sm:$0xff] %v643
        %682 = vst [vmem:[#allocation2 + $0x30] sm:$0xff] %v537
        %683 = vst [vmem:[#allocation2 + $0x38] sm:$0xff] %v539
        %684 = vst [vmem:[#allocation2 + $0x40] sm:$0xff] %v648
        %685 = vst [vmem:[#allocation2 + $0x48] sm:$0xff] %v543
        %686 = vst [vmem:[#allocation2 + $0x50] sm:$0xff] %v545
        %687 = vst [vmem:[#allocation2 + $0x58] sm:$0xff] %v653
        %688 = vst [vmem:[#allocation2 + $0x60] sm:$0xff] %v549
        %689 = vst [vmem:[#allocation2 + $0x68] sm:$0xff] %v551
        %690 = vst [vmem:[#allocation2 + $0x70] sm:$0xff] %v658
        %691 = vst [vmem:[#allocation2 + $0x78] sm:$0xff] %v555
        %692 = vst [vmem:[#allocation2 + $0x80] sm:$0xff] %v557
        %693 = vst [vmem:[#allocation2 + $0x88] sm:$0xff] %v663
        %694 = vst [vmem:[#allocation2 + $0x90] sm:$0xff] %v561
        %695 = vst [vmem:[#allocation2 + $0x98] sm:$0xff] %v563
        %696 = vst [vmem:[#allocation2 + $0xa0] sm:$0xff] %v668
        %697 = vst [vmem:[#allocation2 + $0xa8] sm:$0xff] %v567
        %698 = vst [vmem:[#allocation2 + $0xb0] sm:$0xff] %v569
        %699 = vst [vmem:[#allocation2 + $0xb8] sm:$0xff] %v673
        %v700 = vld [vmem:[%s326] sm:$0xff]
        %v701 = vld [vmem:[%s326 + $0x8] sm:$0xff]
        %v702 = vld [vmem:[%s326 + $0x10] sm:$0xff]
        %v703 = vld [vmem:[%s326 + $0x18] sm:$0xff]
        %v704 = vld [vmem:[%s326 + $0x20] sm:$0xff]
        %v705 = vld [vmem:[%s326 + $0x28] sm:$0xff]
        %v706 = vld [vmem:[%s326 + $0x30] sm:$0xff]
        %v707 = vld [vmem:[%s326 + $0x38] sm:$0xff]
        %v708 = vld [vmem:[%s326 + $0x40] sm:$0xff]
        %v709 = vld [vmem:[%s326 + $0x48] sm:$0xff]
        %v710 = vld [vmem:[%s326 + $0x50] sm:$0xff]
        %v711 = vld [vmem:[%s326 + $0x58] sm:$0xff]
        %v712 = vld [vmem:[%s326 + $0x60] sm:$0xff]
        %v713 = vld [vmem:[%s326 + $0x68] sm:$0xff]
        %v714 = vld [vmem:[%s326 + $0x70] sm:$0xff]
        %v715 = vld [vmem:[%s326 + $0x78] sm:$0xff]
        %v716 = vld [vmem:[%s326 + $0x80] sm:$0xff]
        %v717 = vld [vmem:[%s326 + $0x88] sm:$0xff]
        %v718 = vld [vmem:[%s326 + $0x90] sm:$0xff]
        %v719 = vld [vmem:[%s326 + $0x98] sm:$0xff]
        %v720 = vld [vmem:[%s326 + $0xa0] sm:$0xff]
        %v721 = vld [vmem:[%s326 + $0xa8] sm:$0xff]
        %v722 = vld [vmem:[%s326 + $0xb0] sm:$0xff]
        %v723 = vld [vmem:[%s326 + $0xb8] sm:$0xff]
        %v724 = vld [vmem:[%s326 + $0xc0] sm:$0xff]
        %v725 = vld [vmem:[%s326 + $0xc8] sm:$0xff]
        %v726 = vld [vmem:[%s326 + $0xd0] sm:$0xff]
        %v727 = vld [vmem:[%s326 + $0xd8] sm:$0xff]
        %v728 = vld [vmem:[%s326 + $0xe0] sm:$0xff]
        %v729 = vld [vmem:[%s326 + $0xe8] sm:$0xff]
        %v730 = vld [vmem:[%s326 + $0xf0] sm:$0xff]
        %v731 = vld [vmem:[%s326 + $0xf8] sm:$0xff]
        %v732 = vld [vmem:[%s326 + $0x100] sm:$0xff]
        %v733 = vld [vmem:[%s326 + $0x108] sm:$0xff]
        %v734 = vld [vmem:[%s326 + $0x110] sm:$0xff]
        %v735 = vld [vmem:[%s326 + $0x118] sm:$0xff]
        %v736 = vld [vmem:[%s326 + $0x120] sm:$0xff]
        %v737 = vld [vmem:[%s326 + $0x128] sm:$0xff]
        %v738 = vld [vmem:[%s326 + $0x130] sm:$0xff]
        %v739 = vld [vmem:[%s326 + $0x138] sm:$0xff]
        %v740 = vld [vmem:[%s326 + $0x140] sm:$0xff]
        %v741 = vld [vmem:[%s326 + $0x148] sm:$0xff]
        %v742 = vld [vmem:[%s326 + $0x150] sm:$0xff]
        %v743 = vld [vmem:[%s326 + $0x158] sm:$0xff]
        %v744 = vld [vmem:[%s326 + $0x160] sm:$0xff]
        %v745 = vld [vmem:[%s326 + $0x168] sm:$0xff]
        %v746 = vld [vmem:[%s326 + $0x170] sm:$0xff]
        %v747 = vld [vmem:[%s326 + $0x178] sm:$0xff]
        %v748 = vld [vmem:[%s384] sm:$0x1]
        %v750 = vlaneseq
        %v751 = vshrl.u32 %v750, 7
        %v752 = vsub.s32 0, %v751
        %v753 = vrot.slane %v748, %v752
        %p755 = scmp.eq.s32.totalorder %s31, 0
        %s756 = scalar_select %p755, 0, 7
        %s757 = smul.u32 %s756, 8
        %s758 = sshra.s32 %s757, 3
        %s759 = sand.u32 %s757, 7
        %s760 = smul.u32 %s758, 3
        %s761 = smul.addr %s760, 8
        %s762 = scalar_lea.vmem [#allocation2], %s761
        %v763 = vld [vmem:[%s762] sm:$0xff]
        %v764 = vld [vmem:[%s762 + $0x8] sm:$0xff]
        %v765 = vld [vmem:[%s762 + $0x10] sm:$0xff]
        %766 = vmatprep.subr.mxu0 %v746
        %767 = vmatpush1.msra.mxu0 %v745
        %768 = vmatprep.subr.mxu0 %v743
        %769 = vmatpush1.msra.mxu0 %v742
        %770 = vmatprep.subr.mxu0 %v740
        %771 = vmatpush1.msra.mxu0 %v739
        %772 = vmatprep.subr.mxu0 %v737
        %773 = vmatpush1.msra.mxu0 %v736
        %774 = vmatprep.subr.mxu0 %v734
        %775 = vmatpush1.msra.mxu0 %v733
        %776 = vmatprep.subr.mxu0 %v731
        %777 = vmatpush1.msra.mxu0 %v730
        %778 = vmatprep.subr.mxu0 %v728
        %779 = vmatpush1.msra.mxu0 %v727
        %780 = vmatprep.subr.mxu0 %v725
        %781 = vmatpush1.msra.mxu0 %v724
        %782 = vmatprep.subr.mxu0 %v722
        %783 = vmatpush1.msra.mxu0 %v721
        %784 = vmatprep.subr.mxu0 %v719
        %785 = vmatpush1.msra.mxu0 %v718
        %786 = vmatprep.subr.mxu0 %v716
        %787 = vmatpush1.msra.mxu0 %v715
        %788 = vmatprep.subr.mxu0 %v713
        %789 = vmatpush1.msra.mxu0 %v712
        %790 = vmatprep.subr.mxu0 %v710
        %791 = vmatpush1.msra.mxu0 %v709
        %792 = vmatprep.subr.mxu0 %v707
        %793 = vmatpush1.msra.mxu0 %v706
        %794 = vmatprep.subr.mxu0 %v704
        %795 = vmatpush1.msra.mxu0 %v703
        %796 = vmatprep.subr.mxu0 %v701
        %797 = vmatpush1.msra.mxu0 %v700
        %798 = vmatprep.subr.mxu0 0.0
        %799 = vmatpush2.msra.mxu0 0.0
        %800 = vmatprep.subr.mxu0 0.0
        %801 = vmatpush2.msra.mxu0 0.0
        %802 = vmatprep.subr.mxu0 0.0
        %803 = vmatpush2.msra.mxu0 0.0
        %804 = vmatprep.subr.mxu0 0.0
        %805 = vmatpush2.msra.mxu0 0.0
        %806 = vmatprep.subr.mxu0 0.0
        %807 = vmatpush2.msra.mxu0 0.0
        %808 = vmatprep.subr.mxu0 0.0
        %809 = vmatpush2.msra.mxu0 0.0
        %810 = vmatprep.subr.mxu0 0.0
        %811 = vmatpush2.msra.mxu0 0.0
        %812 = vmatprep.subr.mxu0 0.0
        %813 = vmatpush2.msra.mxu0 0.0
        %814 = vmatprep.subr.mxu0 0.0
        %815 = vmatpush2.msra.mxu0 0.0
        %816 = vmatprep.subr.mxu0 0.0
        %817 = vmatpush2.msra.mxu0 0.0
        %818 = vmatprep.subr.mxu0 0.0
        %819 = vmatpush2.msra.mxu0 0.0
        %820 = vmatprep.subr.mxu0 0.0
        %821 = vmatpush2.msra.mxu0 0.0
        %822 = vmatprep.subr.mxu0 0.0
        %823 = vmatpush2.msra.mxu0 0.0
        %824 = vmatprep.subr.mxu0 0.0
        %825 = vmatpush2.msra.mxu0 0.0
        %826 = vmatprep.subr.mxu0 0.0
        %827 = vmatpush2.msra.mxu0 0.0
        %828 = vmatprep.subr.mxu0 0.0
        %829 = vmatpush2.msra.mxu0 0.0
        %830 = vmatprep.mubr.f32.mxu0 0.0
        %831 = vmatmul.mubr.f32.gmra.mxu0 0.0
        %v832 = vpop.f32.mrf.mxu0
        %v833 = vadd.f32 0.0, %v832
        %v834 = vpop.f32.mrf.mxu0
        %v835 = vadd.f32 0.0, %v834
        %836 = vdwg.mxu0
        %837 = vmatprep.subr.mxu0 0.0
        %838 = vmatpush1.msra.mxu0 %v747
        %839 = vmatprep.subr.mxu0 0.0
        %840 = vmatpush1.msra.mxu0 %v744
        %841 = vmatprep.subr.mxu0 0.0
        %842 = vmatpush1.msra.mxu0 %v741
        %843 = vmatprep.subr.mxu0 0.0
        %844 = vmatpush1.msra.mxu0 %v738
        %845 = vmatprep.subr.mxu0 0.0
        %846 = vmatpush1.msra.mxu0 %v735
        %847 = vmatprep.subr.mxu0 0.0
        %848 = vmatpush1.msra.mxu0 %v732
        %849 = vmatprep.subr.mxu0 0.0
        %850 = vmatpush1.msra.mxu0 %v729
        %851 = vmatprep.subr.mxu0 0.0
        %852 = vmatpush1.msra.mxu0 %v726
        %853 = vmatprep.subr.mxu0 0.0
        %854 = vmatpush1.msra.mxu0 %v723
        %855 = vmatprep.subr.mxu0 0.0
        %856 = vmatpush1.msra.mxu0 %v720
        %857 = vmatprep.subr.mxu0 0.0
        %858 = vmatpush1.msra.mxu0 %v717
        %859 = vmatprep.subr.mxu0 0.0
        %860 = vmatpush1.msra.mxu0 %v714
        %861 = vmatprep.subr.mxu0 0.0
        %862 = vmatpush1.msra.mxu0 %v711
        %863 = vmatprep.subr.mxu0 0.0
        %864 = vmatpush1.msra.mxu0 %v708
        %865 = vmatprep.subr.mxu0 0.0
        %866 = vmatpush1.msra.mxu0 %v705
        %867 = vmatprep.subr.mxu0 0.0
        %868 = vmatpush1.msra.mxu0 %v702
        %869 = vmatprep.subr.mxu0 0.0
        %870 = vmatpush2.msra.mxu0 0.0
        %871 = vmatprep.subr.mxu0 0.0
        %872 = vmatpush2.msra.mxu0 0.0
        %873 = vmatprep.subr.mxu0 0.0
        %874 = vmatpush2.msra.mxu0 0.0
        %875 = vmatprep.subr.mxu0 0.0
        %876 = vmatpush2.msra.mxu0 0.0
        %877 = vmatprep.subr.mxu0 0.0
        %878 = vmatpush2.msra.mxu0 0.0
        %879 = vmatprep.subr.mxu0 0.0
        %880 = vmatpush2.msra.mxu0 0.0
        %881 = vmatprep.subr.mxu0 0.0
        %882 = vmatpush2.msra.mxu0 0.0
        %883 = vmatprep.subr.mxu0 0.0
        %884 = vmatpush2.msra.mxu0 0.0
        %885 = vmatprep.subr.mxu0 0.0
        %886 = vmatpush2.msra.mxu0 0.0
        %887 = vmatprep.subr.mxu0 0.0
        %888 = vmatpush2.msra.mxu0 0.0
        %889 = vmatprep.subr.mxu0 0.0
        %890 = vmatpush2.msra.mxu0 0.0
        %891 = vmatprep.subr.mxu0 0.0
        %892 = vmatpush2.msra.mxu0 0.0
        %893 = vmatprep.subr.mxu0 0.0
        %894 = vmatpush2.msra.mxu0 0.0
        %895 = vmatprep.subr.mxu0 0.0
        %896 = vmatpush2.msra.mxu0 0.0
        %897 = vmatprep.subr.mxu0 0.0
        %898 = vmatpush2.msra.mxu0 0.0
        %899 = vmatprep.subr.mxu0 0.0
        %900 = vmatpush2.msra.mxu0 0.0
        %901 = vmatprep.mubr.f32.mxu0 0.0
        %902 = vmatmul.mubr.f32.gmra.mxu0 0.0
        %v903 = vpop.f32.mrf.mxu0
        %v904 = vadd.f32 0.0, %v903
        %v905 = vpop.f32.mrf.mxu0
        %906 = vdwg.mxu0
        %v907 = vadd.f32 %v763, %v833
        %v908 = vmul.f32 %v907, 0.5
        %v909 = vtanh.pop %v908
        %v910 = vadd.f32 %v909, 1.0
        %v911 = vmul.f32 %v910, 0.5
        %v912 = vadd.f32 %v764, %v835
        %v913 = vmul.f32 %v912, 0.5
        %v914 = vtanh.pop %v913
        %v915 = vadd.f32 %v914, 1.0
        %v916 = vmul.f32 %v915, 0.5
        %v917 = vadd.f32 %v904, %v753
        %v918 = vmul.f32 %v911, %v917
        %v919 = vadd.f32 %v765, %v918
        %v920 = vtanh.pop %v919
        %v921 = vsub.f32 1.0, %v916
        %v922 = vmul.f32 %v921, %v920
        %v923 = vmul.f32 %v916, 0.0
        %v924 = vadd.f32 %v922, %v923
        %s925 = scalar_lea.vmem %s374, %s757 [#allocation11]
        %926 = vst [vmem:[%s925] sm:$0xff] %v924
        %s927 = scalar_select %p755, 1, 6
        %s928 = smul.u32 %s927, 8
        %s929 = sshra.s32 %s928, 3
        %s930 = sand.u32 %s928, 7
        %s931 = smul.u32 %s929, 3
        %s932 = smul.addr %s931, 8
        %s933 = scalar_lea.vmem [#allocation2], %s932
        %v934 = vld [vmem:[%s933] sm:$0xff]
        %v935 = vld [vmem:[%s933 + $0x8] sm:$0xff]
        %v936 = vld [vmem:[%s933 + $0x10] sm:$0xff]
        %937 = vmatprep.subr.mxu0 %v746
        %938 = vmatpush1.msra.mxu0 %v745
        %939 = vmatprep.subr.mxu0 %v743
        %940 = vmatpush1.msra.mxu0 %v742
        %941 = vmatprep.subr.mxu0 %v740
        %942 = vmatpush1.msra.mxu0 %v739
        %943 = vmatprep.subr.mxu0 %v737
        %944 = vmatpush1.msra.mxu0 %v736
        %945 = vmatprep.subr.mxu0 %v734
        %946 = vmatpush1.msra.mxu0 %v733
        %947 = vmatprep.subr.mxu0 %v731
        %948 = vmatpush1.msra.mxu0 %v730
        %949 = vmatprep.subr.mxu0 %v728
        %950 = vmatpush1.msra.mxu0 %v727
        %951 = vmatprep.subr.mxu0 %v725
        %952 = vmatpush1.msra.mxu0 %v724
        %953 = vmatprep.subr.mxu0 %v722
        %954 = vmatpush1.msra.mxu0 %v721
        %955 = vmatprep.subr.mxu0 %v719
        %956 = vmatpush1.msra.mxu0 %v718
        %957 = vmatprep.subr.mxu0 %v716
        %958 = vmatpush1.msra.mxu0 %v715
        %959 = vmatprep.subr.mxu0 %v713
        %960 = vmatpush1.msra.mxu0 %v712
        %961 = vmatprep.subr.mxu0 %v710
        %962 = vmatpush1.msra.mxu0 %v709
        %963 = vmatprep.subr.mxu0 %v707
        %964 = vmatpush1.msra.mxu0 %v706
        %965 = vmatprep.subr.mxu0 %v704
        %966 = vmatpush1.msra.mxu0 %v703
        %967 = vmatprep.subr.mxu0 %v701
        %968 = vmatpush1.msra.mxu0 %v700
        %969 = vmatprep.subr.mxu0 0.0
        %970 = vmatpush2.msra.mxu0 0.0
        %971 = vmatprep.subr.mxu0 0.0
        %972 = vmatpush2.msra.mxu0 0.0
        %973 = vmatprep.subr.mxu0 0.0
        %974 = vmatpush2.msra.mxu0 0.0
        %975 = vmatprep.subr.mxu0 0.0
        %976 = vmatpush2.msra.mxu0 0.0
        %977 = vmatprep.subr.mxu0 0.0
        %978 = vmatpush2.msra.mxu0 0.0
        %979 = vmatprep.subr.mxu0 0.0
        %980 = vmatpush2.msra.mxu0 0.0
        %981 = vmatprep.subr.mxu0 0.0
        %982 = vmatpush2.msra.mxu0 0.0
        %983 = vmatprep.subr.mxu0 0.0
        %984 = vmatpush2.msra.mxu0 0.0
        %985 = vmatprep.subr.mxu0 0.0
        %986 = vmatpush2.msra.mxu0 0.0
        %987 = vmatprep.subr.mxu0 0.0
        %988 = vmatpush2.msra.mxu0 0.0
        %989 = vmatprep.subr.mxu0 0.0
        %990 = vmatpush2.msra.mxu0 0.0
        %991 = vmatprep.subr.mxu0 0.0
        %992 = vmatpush2.msra.mxu0 0.0
        %993 = vmatprep.subr.mxu0 0.0
        %994 = vmatpush2.msra.mxu0 0.0
        %995 = vmatprep.subr.mxu0 0.0
        %996 = vmatpush2.msra.mxu0 0.0
        %997 = vmatprep.subr.mxu0 0.0
        %998 = vmatpush2.msra.mxu0 0.0
        %999 = vmatprep.subr.mxu0 0.0
        %1000 = vmatpush2.msra.mxu0 0.0
        %1001 = vmatprep.mubr.f32.mxu0 0.0
        %1002 = vmatmul.mubr.f32.gmra.mxu0 %v924
        %v1003 = vpop.f32.mrf.mxu0
        %v1004 = vadd.f32 0.0, %v1003
        %v1005 = vpop.f32.mrf.mxu0
        %v1006 = vadd.f32 0.0, %v1005
        %1007 = vdwg.mxu0
        %1008 = vmatprep.subr.mxu0 0.0
        %1009 = vmatpush1.msra.mxu0 %v747
        %1010 = vmatprep.subr.mxu0 0.0
        %1011 = vmatpush1.msra.mxu0 %v744
        %1012 = vmatprep.subr.mxu0 0.0
        %1013 = vmatpush1.msra.mxu0 %v741
        %1014 = vmatprep.subr.mxu0 0.0
        %1015 = vmatpush1.msra.mxu0 %v738
        %1016 = vmatprep.subr.mxu0 0.0
        %1017 = vmatpush1.msra.mxu0 %v735
        %1018 = vmatprep.subr.mxu0 0.0
        %1019 = vmatpush1.msra.mxu0 %v732
        %1020 = vmatprep.subr.mxu0 0.0
        %1021 = vmatpush1.msra.mxu0 %v729
        %1022 = vmatprep.subr.mxu0 0.0
        %1023 = vmatpush1.msra.mxu0 %v726
        %1024 = vmatprep.subr.mxu0 0.0
        %1025 = vmatpush1.msra.mxu0 %v723
        %1026 = vmatprep.subr.mxu0 0.0
        %1027 = vmatpush1.msra.mxu0 %v720
        %1028 = vmatprep.subr.mxu0 0.0
        %1029 = vmatpush1.msra.mxu0 %v717
        %1030 = vmatprep.subr.mxu0 0.0
        %1031 = vmatpush1.msra.mxu0 %v714
        %1032 = vmatprep.subr.mxu0 0.0
        %1033 = vmatpush1.msra.mxu0 %v711
        %1034 = vmatprep.subr.mxu0 0.0
        %1035 = vmatpush1.msra.mxu0 %v708
        %1036 = vmatprep.subr.mxu0 0.0
        %1037 = vmatpush1.msra.mxu0 %v705
        %1038 = vmatprep.subr.mxu0 0.0
        %1039 = vmatpush1.msra.mxu0 %v702
        %1040 = vmatprep.subr.mxu0 0.0
        %1041 = vmatpush2.msra.mxu0 0.0
        %1042 = vmatprep.subr.mxu0 0.0
        %1043 = vmatpush2.msra.mxu0 0.0
        %1044 = vmatprep.subr.mxu0 0.0
        %1045 = vmatpush2.msra.mxu0 0.0
        %1046 = vmatprep.subr.mxu0 0.0
        %1047 = vmatpush2.msra.mxu0 0.0
        %1048 = vmatprep.subr.mxu0 0.0
        %1049 = vmatpush2.msra.mxu0 0.0
        %1050 = vmatprep.subr.mxu0 0.0
        %1051 = vmatpush2.msra.mxu0 0.0
        %1052 = vmatprep.subr.mxu0 0.0
        %1053 = vmatpush2.msra.mxu0 0.0
        %1054 = vmatprep.subr.mxu0 0.0
        %1055 = vmatpush2.msra.mxu0 0.0
        %1056 = vmatprep.subr.mxu0 0.0
        %1057 = vmatpush2.msra.mxu0 0.0
        %1058 = vmatprep.subr.mxu0 0.0
        %1059 = vmatpush2.msra.mxu0 0.0
        %1060 = vmatprep.subr.mxu0 0.0
        %1061 = vmatpush2.msra.mxu0 0.0
        %1062 = vmatprep.subr.mxu0 0.0
        %1063 = vmatpush2.msra.mxu0 0.0
        %1064 = vmatprep.subr.mxu0 0.0
        %1065 = vmatpush2.msra.mxu0 0.0
        %1066 = vmatprep.subr.mxu0 0.0
        %1067 = vmatpush2.msra.mxu0 0.0
        %1068 = vmatprep.subr.mxu0 0.0
        %1069 = vmatpush2.msra.mxu0 0.0
        %1070 = vmatprep.subr.mxu0 0.0
        %1071 = vmatpush2.msra.mxu0 0.0
        %1072 = vmatprep.mubr.f32.mxu0 0.0
        %1073 = vmatmul.mubr.f32.gmra.mxu0 %v924
        %v1074 = vpop.f32.mrf.mxu0
        %v1075 = vadd.f32 0.0, %v1074
        %v1076 = vpop.f32.mrf.mxu0
        %1077 = vdwg.mxu0
        %v1078 = vadd.f32 %v934, %v1004
        %v1079 = vmul.f32 %v1078, 0.5
        %v1080 = vtanh.pop %v1079
        %v1081 = vadd.f32 %v1080, 1.0
        %v1082 = vmul.f32 %v1081, 0.5
        %v1083 = vadd.f32 %v935, %v1006
        %v1084 = vmul.f32 %v1083, 0.5
        %v1085 = vtanh.pop %v1084
        %v1086 = vadd.f32 %v1085, 1.0
        %v1087 = vmul.f32 %v1086, 0.5
        %v1088 = vadd.f32 %v1075, %v753
        %v1089 = vmul.f32 %v1082, %v1088
        %v1090 = vadd.f32 %v936, %v1089
        %v1091 = vtanh.pop %v1090
        %v1092 = vsub.f32 1.0, %v1087
        %v1093 = vmul.f32 %v1092, %v1091
        %v1094 = vmul.f32 %v1087, %v924
        %v1095 = vadd.f32 %v1093, %v1094
        %s1096 = scalar_lea.vmem %s374, %s928 [#allocation11]
        %1097 = vst [vmem:[%s1096] sm:$0xff] %v1095
        %s1098 = scalar_select %p755, 2, 5
        %s1099 = smul.u32 %s1098, 8
        %s1100 = sshra.s32 %s1099, 3
        %s1101 = sand.u32 %s1099, 7
        %s1102 = smul.u32 %s1100, 3
        %s1103 = smul.addr %s1102, 8
        %s1104 = scalar_lea.vmem [#allocation2], %s1103
        %v1105 = vld [vmem:[%s1104] sm:$0xff]
        %v1106 = vld [vmem:[%s1104 + $0x8] sm:$0xff]
        %v1107 = vld [vmem:[%s1104 + $0x10] sm:$0xff]
        %1108 = vmatprep.subr.mxu0 %v746
        %1109 = vmatpush1.msra.mxu0 %v745
        %1110 = vmatprep.subr.mxu0 %v743
        %1111 = vmatpush1.msra.mxu0 %v742
        %1112 = vmatprep.subr.mxu0 %v740
        %1113 = vmatpush1.msra.mxu0 %v739
        %1114 = vmatprep.subr.mxu0 %v737
        %1115 = vmatpush1.msra.mxu0 %v736
        %1116 = vmatprep.subr.mxu0 %v734
        %1117 = vmatpush1.msra.mxu0 %v733
        %1118 = vmatprep.subr.mxu0 %v731
        %1119 = vmatpush1.msra.mxu0 %v730
        %1120 = vmatprep.subr.mxu0 %v728
        %1121 = vmatpush1.msra.mxu0 %v727
        %1122 = vmatprep.subr.mxu0 %v725
        %1123 = vmatpush1.msra.mxu0 %v724
        %1124 = vmatprep.subr.mxu0 %v722
        %1125 = vmatpush1.msra.mxu0 %v721
        %1126 = vmatprep.subr.mxu0 %v719
        %1127 = vmatpush1.msra.mxu0 %v718
        %1128 = vmatprep.subr.mxu0 %v716
        %1129 = vmatpush1.msra.mxu0 %v715
        %1130 = vmatprep.subr.mxu0 %v713
        %1131 = vmatpush1.msra.mxu0 %v712
        %1132 = vmatprep.subr.mxu0 %v710
        %1133 = vmatpush1.msra.mxu0 %v709
        %1134 = vmatprep.subr.mxu0 %v707
        %1135 = vmatpush1.msra.mxu0 %v706
        %1136 = vmatprep.subr.mxu0 %v704
        %1137 = vmatpush1.msra.mxu0 %v703
        %1138 = vmatprep.subr.mxu0 %v701
        %1139 = vmatpush1.msra.mxu0 %v700
        %1140 = vmatprep.subr.mxu0 0.0
        %1141 = vmatpush2.msra.mxu0 0.0
        %1142 = vmatprep.subr.mxu0 0.0
        %1143 = vmatpush2.msra.mxu0 0.0
        %1144 = vmatprep.subr.mxu0 0.0
        %1145 = vmatpush2.msra.mxu0 0.0
        %1146 = vmatprep.subr.mxu0 0.0
        %1147 = vmatpush2.msra.mxu0 0.0
        %1148 = vmatprep.subr.mxu0 0.0
        %1149 = vmatpush2.msra.mxu0 0.0
        %1150 = vmatprep.subr.mxu0 0.0
        %1151 = vmatpush2.msra.mxu0 0.0
        %1152 = vmatprep.subr.mxu0 0.0
        %1153 = vmatpush2.msra.mxu0 0.0
        %1154 = vmatprep.subr.mxu0 0.0
        %1155 = vmatpush2.msra.mxu0 0.0
        %1156 = vmatprep.subr.mxu0 0.0
        %1157 = vmatpush2.msra.mxu0 0.0
        %1158 = vmatprep.subr.mxu0 0.0
        %1159 = vmatpush2.msra.mxu0 0.0
        %1160 = vmatprep.subr.mxu0 0.0
        %1161 = vmatpush2.msra.mxu0 0.0
        %1162 = vmatprep.subr.mxu0 0.0
        %1163 = vmatpush2.msra.mxu0 0.0
        %1164 = vmatprep.subr.mxu0 0.0
        %1165 = vmatpush2.msra.mxu0 0.0
        %1166 = vmatprep.subr.mxu0 0.0
        %1167 = vmatpush2.msra.mxu0 0.0
        %1168 = vmatprep.subr.mxu0 0.0
        %1169 = vmatpush2.msra.mxu0 0.0
        %1170 = vmatprep.subr.mxu0 0.0
        %1171 = vmatpush2.msra.mxu0 0.0
        %1172 = vmatprep.mubr.f32.mxu0 0.0
        %1173 = vmatmul.mubr.f32.gmra.mxu0 %v1095
        %v1174 = vpop.f32.mrf.mxu0
        %v1175 = vadd.f32 0.0, %v1174
        %v1176 = vpop.f32.mrf.mxu0
        %v1177 = vadd.f32 0.0, %v1176
        %1178 = vdwg.mxu0
        %1179 = vmatprep.subr.mxu0 0.0
        %1180 = vmatpush1.msra.mxu0 %v747
        %1181 = vmatprep.subr.mxu0 0.0
        %1182 = vmatpush1.msra.mxu0 %v744
        %1183 = vmatprep.subr.mxu0 0.0
        %1184 = vmatpush1.msra.mxu0 %v741
        %1185 = vmatprep.subr.mxu0 0.0
        %1186 = vmatpush1.msra.mxu0 %v738
        %1187 = vmatprep.subr.mxu0 0.0
        %1188 = vmatpush1.msra.mxu0 %v735
        %1189 = vmatprep.subr.mxu0 0.0
        %1190 = vmatpush1.msra.mxu0 %v732
        %1191 = vmatprep.subr.mxu0 0.0
        %1192 = vmatpush1.msra.mxu0 %v729
        %1193 = vmatprep.subr.mxu0 0.0
        %1194 = vmatpush1.msra.mxu0 %v726
        %1195 = vmatprep.subr.mxu0 0.0
        %1196 = vmatpush1.msra.mxu0 %v723
        %1197 = vmatprep.subr.mxu0 0.0
        %1198 = vmatpush1.msra.mxu0 %v720
        %1199 = vmatprep.subr.mxu0 0.0
        %1200 = vmatpush1.msra.mxu0 %v717
        %1201 = vmatprep.subr.mxu0 0.0
        %1202 = vmatpush1.msra.mxu0 %v714
        %1203 = vmatprep.subr.mxu0 0.0
        %1204 = vmatpush1.msra.mxu0 %v711
        %1205 = vmatprep.subr.mxu0 0.0
        %1206 = vmatpush1.msra.mxu0 %v708
        %1207 = vmatprep.subr.mxu0 0.0
        %1208 = vmatpush1.msra.mxu0 %v705
        %1209 = vmatprep.subr.mxu0 0.0
        %1210 = vmatpush1.msra.mxu0 %v702
        %1211 = vmatprep.subr.mxu0 0.0
        %1212 = vmatpush2.msra.mxu0 0.0
        %1213 = vmatprep.subr.mxu0 0.0
        %1214 = vmatpush2.msra.mxu0 0.0
        %1215 = vmatprep.subr.mxu0 0.0
        %1216 = vmatpush2.msra.mxu0 0.0
        %1217 = vmatprep.subr.mxu0 0.0
        %1218 = vmatpush2.msra.mxu0 0.0
        %1219 = vmatprep.subr.mxu0 0.0
        %1220 = vmatpush2.msra.mxu0 0.0
        %1221 = vmatprep.subr.mxu0 0.0
        %1222 = vmatpush2.msra.mxu0 0.0
        %1223 = vmatprep.subr.mxu0 0.0
        %1224 = vmatpush2.msra.mxu0 0.0
        %1225 = vmatprep.subr.mxu0 0.0
        %1226 = vmatpush2.msra.mxu0 0.0
        %1227 = vmatprep.subr.mxu0 0.0
        %1228 = vmatpush2.msra.mxu0 0.0
        %1229 = vmatprep.subr.mxu0 0.0
        %1230 = vmatpush2.msra.mxu0 0.0
        %1231 = vmatprep.subr.mxu0 0.0
        %1232 = vmatpush2.msra.mxu0 0.0
        %1233 = vmatprep.subr.mxu0 0.0
        %1234 = vmatpush2.msra.mxu0 0.0
        %1235 = vmatprep.subr.mxu0 0.0
        %1236 = vmatpush2.msra.mxu0 0.0
        %1237 = vmatprep.subr.mxu0 0.0
        %1238 = vmatpush2.msra.mxu0 0.0
        %1239 = vmatprep.subr.mxu0 0.0
        %1240 = vmatpush2.msra.mxu0 0.0
        %1241 = vmatprep.subr.mxu0 0.0
        %1242 = vmatpush2.msra.mxu0 0.0
        %1243 = vmatprep.mubr.f32.mxu0 0.0
        %1244 = vmatmul.mubr.f32.gmra.mxu0 %v1095
        %v1245 = vpop.f32.mrf.mxu0
        %v1246 = vadd.f32 0.0, %v1245
        %v1247 = vpop.f32.mrf.mxu0
        %1248 = vdwg.mxu0
        %v1249 = vadd.f32 %v1105, %v1175
        %v1250 = vmul.f32 %v1249, 0.5
        %v1251 = vtanh.pop %v1250
        %v1252 = vadd.f32 %v1251, 1.0
        %v1253 = vmul.f32 %v1252, 0.5
        %v1254 = vadd.f32 %v1106, %v1177
        %v1255 = vmul.f32 %v1254, 0.5
        %v1256 = vtanh.pop %v1255
        %v1257 = vadd.f32 %v1256, 1.0
        %v1258 = vmul.f32 %v1257, 0.5
        %v1259 = vadd.f32 %v1246, %v753
        %v1260 = vmul.f32 %v1253, %v1259
        %v1261 = vadd.f32 %v1107, %v1260
        %v1262 = vtanh.pop %v1261
        %v1263 = vsub.f32 1.0, %v1258
        %v1264 = vmul.f32 %v1263, %v1262
        %v1265 = vmul.f32 %v1258, %v1095
        %v1266 = vadd.f32 %v1264, %v1265
        %s1267 = scalar_lea.vmem %s374, %s1099 [#allocation11]
        %1268 = vst [vmem:[%s1267] sm:$0xff] %v1266
        %s1269 = scalar_select %p755, 3, 4
        %s1270 = smul.u32 %s1269, 8
        %s1271 = sshra.s32 %s1270, 3
        %s1272 = sand.u32 %s1270, 7
        %s1273 = smul.u32 %s1271, 3
        %s1274 = smul.addr %s1273, 8
        %s1275 = scalar_lea.vmem [#allocation2], %s1274
        %v1276 = vld [vmem:[%s1275] sm:$0xff]
        %v1277 = vld [vmem:[%s1275 + $0x8] sm:$0xff]
        %v1278 = vld [vmem:[%s1275 + $0x10] sm:$0xff]
        %1279 = vmatprep.subr.mxu0 %v746
        %1280 = vmatpush1.msra.mxu0 %v745
        %1281 = vmatprep.subr.mxu0 %v743
        %1282 = vmatpush1.msra.mxu0 %v742
        %1283 = vmatprep.subr.mxu0 %v740
        %1284 = vmatpush1.msra.mxu0 %v739
        %1285 = vmatprep.subr.mxu0 %v737
        %1286 = vmatpush1.msra.mxu0 %v736
        %1287 = vmatprep.subr.mxu0 %v734
        %1288 = vmatpush1.msra.mxu0 %v733
        %1289 = vmatprep.subr.mxu0 %v731
        %1290 = vmatpush1.msra.mxu0 %v730
        %1291 = vmatprep.subr.mxu0 %v728
        %1292 = vmatpush1.msra.mxu0 %v727
        %1293 = vmatprep.subr.mxu0 %v725
        %1294 = vmatpush1.msra.mxu0 %v724
        %1295 = vmatprep.subr.mxu0 %v722
        %1296 = vmatpush1.msra.mxu0 %v721
        %1297 = vmatprep.subr.mxu0 %v719
        %1298 = vmatpush1.msra.mxu0 %v718
        %1299 = vmatprep.subr.mxu0 %v716
        %1300 = vmatpush1.msra.mxu0 %v715
        %1301 = vmatprep.subr.mxu0 %v713
        %1302 = vmatpush1.msra.mxu0 %v712
        %1303 = vmatprep.subr.mxu0 %v710
        %1304 = vmatpush1.msra.mxu0 %v709
        %1305 = vmatprep.subr.mxu0 %v707
        %1306 = vmatpush1.msra.mxu0 %v706
        %1307 = vmatprep.subr.mxu0 %v704
        %1308 = vmatpush1.msra.mxu0 %v703
        %1309 = vmatprep.subr.mxu0 %v701
        %1310 = vmatpush1.msra.mxu0 %v700
        %1311 = vmatprep.subr.mxu0 0.0
        %1312 = vmatpush2.msra.mxu0 0.0
        %1313 = vmatprep.subr.mxu0 0.0
        %1314 = vmatpush2.msra.mxu0 0.0
        %1315 = vmatprep.subr.mxu0 0.0
        %1316 = vmatpush2.msra.mxu0 0.0
        %1317 = vmatprep.subr.mxu0 0.0
        %1318 = vmatpush2.msra.mxu0 0.0
        %1319 = vmatprep.subr.mxu0 0.0
        %1320 = vmatpush2.msra.mxu0 0.0
        %1321 = vmatprep.subr.mxu0 0.0
        %1322 = vmatpush2.msra.mxu0 0.0
        %1323 = vmatprep.subr.mxu0 0.0
        %1324 = vmatpush2.msra.mxu0 0.0
        %1325 = vmatprep.subr.mxu0 0.0
        %1326 = vmatpush2.msra.mxu0 0.0
        %1327 = vmatprep.subr.mxu0 0.0
        %1328 = vmatpush2.msra.mxu0 0.0
        %1329 = vmatprep.subr.mxu0 0.0
        %1330 = vmatpush2.msra.mxu0 0.0
        %1331 = vmatprep.subr.mxu0 0.0
        %1332 = vmatpush2.msra.mxu0 0.0
        %1333 = vmatprep.subr.mxu0 0.0
        %1334 = vmatpush2.msra.mxu0 0.0
        %1335 = vmatprep.subr.mxu0 0.0
        %1336 = vmatpush2.msra.mxu0 0.0
        %1337 = vmatprep.subr.mxu0 0.0
        %1338 = vmatpush2.msra.mxu0 0.0
        %1339 = vmatprep.subr.mxu0 0.0
        %1340 = vmatpush2.msra.mxu0 0.0
        %1341 = vmatprep.subr.mxu0 0.0
        %1342 = vmatpush2.msra.mxu0 0.0
        %1343 = vmatprep.mubr.f32.mxu0 0.0
        %1344 = vmatmul.mubr.f32.gmra.mxu0 %v1266
        %v1345 = vpop.f32.mrf.mxu0
        %v1346 = vadd.f32 0.0, %v1345
        %v1347 = vpop.f32.mrf.mxu0
        %v1348 = vadd.f32 0.0, %v1347
        %1349 = vdwg.mxu0
        %1350 = vmatprep.subr.mxu0 0.0
        %1351 = vmatpush1.msra.mxu0 %v747
        %1352 = vmatprep.subr.mxu0 0.0
        %1353 = vmatpush1.msra.mxu0 %v744
        %1354 = vmatprep.subr.mxu0 0.0
        %1355 = vmatpush1.msra.mxu0 %v741
        %1356 = vmatprep.subr.mxu0 0.0
        %1357 = vmatpush1.msra.mxu0 %v738
        %1358 = vmatprep.subr.mxu0 0.0
        %1359 = vmatpush1.msra.mxu0 %v735
        %1360 = vmatprep.subr.mxu0 0.0
        %1361 = vmatpush1.msra.mxu0 %v732
        %1362 = vmatprep.subr.mxu0 0.0
        %1363 = vmatpush1.msra.mxu0 %v729
        %1364 = vmatprep.subr.mxu0 0.0
        %1365 = vmatpush1.msra.mxu0 %v726
        %1366 = vmatprep.subr.mxu0 0.0
        %1367 = vmatpush1.msra.mxu0 %v723
        %1368 = vmatprep.subr.mxu0 0.0
        %1369 = vmatpush1.msra.mxu0 %v720
        %1370 = vmatprep.subr.mxu0 0.0
        %1371 = vmatpush1.msra.mxu0 %v717
        %1372 = vmatprep.subr.mxu0 0.0
        %1373 = vmatpush1.msra.mxu0 %v714
        %1374 = vmatprep.subr.mxu0 0.0
        %1375 = vmatpush1.msra.mxu0 %v711
        %1376 = vmatprep.subr.mxu0 0.0
        %1377 = vmatpush1.msra.mxu0 %v708
        %1378 = vmatprep.subr.mxu0 0.0
        %1379 = vmatpush1.msra.mxu0 %v705
        %1380 = vmatprep.subr.mxu0 0.0
        %1381 = vmatpush1.msra.mxu0 %v702
        %1382 = vmatprep.subr.mxu0 0.0
        %1383 = vmatpush2.msra.mxu0 0.0
        %1384 = vmatprep.subr.mxu0 0.0
        %1385 = vmatpush2.msra.mxu0 0.0
        %1386 = vmatprep.subr.mxu0 0.0
        %1387 = vmatpush2.msra.mxu0 0.0
        %1388 = vmatprep.subr.mxu0 0.0
        %1389 = vmatpush2.msra.mxu0 0.0
        %1390 = vmatprep.subr.mxu0 0.0
        %1391 = vmatpush2.msra.mxu0 0.0
        %1392 = vmatprep.subr.mxu0 0.0
        %1393 = vmatpush2.msra.mxu0 0.0
        %1394 = vmatprep.subr.mxu0 0.0
        %1395 = vmatpush2.msra.mxu0 0.0
        %1396 = vmatprep.subr.mxu0 0.0
        %1397 = vmatpush2.msra.mxu0 0.0
        %1398 = vmatprep.subr.mxu0 0.0
        %1399 = vmatpush2.msra.mxu0 0.0
        %1400 = vmatprep.subr.mxu0 0.0
        %1401 = vmatpush2.msra.mxu0 0.0
        %1402 = vmatprep.subr.mxu0 0.0
        %1403 = vmatpush2.msra.mxu0 0.0
        %1404 = vmatprep.subr.mxu0 0.0
        %1405 = vmatpush2.msra.mxu0 0.0
        %1406 = vmatprep.subr.mxu0 0.0
        %1407 = vmatpush2.msra.mxu0 0.0
        %1408 = vmatprep.subr.mxu0 0.0
        %1409 = vmatpush2.msra.mxu0 0.0
        %1410 = vmatprep.subr.mxu0 0.0
        %1411 = vmatpush2.msra.mxu0 0.0
        %1412 = vmatprep.subr.mxu0 0.0
        %1413 = vmatpush2.msra.mxu0 0.0
        %1414 = vmatprep.mubr.f32.mxu0 0.0
        %1415 = vmatmul.mubr.f32.gmra.mxu0 %v1266
        %v1416 = vpop.f32.mrf.mxu0
        %v1417 = vadd.f32 0.0, %v1416
        %v1418 = vpop.f32.mrf.mxu0
        %1419 = vdwg.mxu0
        %v1420 = vadd.f32 %v1276, %v1346
        %v1421 = vmul.f32 %v1420, 0.5
        %v1422 = vtanh.pop %v1421
        %v1423 = vadd.f32 %v1422, 1.0
        %v1424 = vmul.f32 %v1423, 0.5
        %v1425 = vadd.f32 %v1277, %v1348
        %v1426 = vmul.f32 %v1425, 0.5
        %v1427 = vtanh.pop %v1426
        %v1428 = vadd.f32 %v1427, 1.0
        %v1429 = vmul.f32 %v1428, 0.5
        %v1430 = vadd.f32 %v1417, %v753
        %v1431 = vmul.f32 %v1424, %v1430
        %v1432 = vadd.f32 %v1278, %v1431
        %v1433 = vtanh.pop %v1432
        %v1434 = vsub.f32 1.0, %v1429
        %v1435 = vmul.f32 %v1434, %v1433
        %v1436 = vmul.f32 %v1429, %v1266
        %v1437 = vadd.f32 %v1435, %v1436
        %s1438 = scalar_lea.vmem %s374, %s1270 [#allocation11]
        %1439 = vst [vmem:[%s1438] sm:$0xff] %v1437
        %s1440 = scalar_select %p755, 4, 3
        %s1441 = smul.u32 %s1440, 8
        %s1442 = sshra.s32 %s1441, 3
        %s1443 = sand.u32 %s1441, 7
        %s1444 = smul.u32 %s1442, 3
        %s1445 = smul.addr %s1444, 8
        %s1446 = scalar_lea.vmem [#allocation2], %s1445
        %v1447 = vld [vmem:[%s1446] sm:$0xff]
        %v1448 = vld [vmem:[%s1446 + $0x8] sm:$0xff]
        %v1449 = vld [vmem:[%s1446 + $0x10] sm:$0xff]
        %1450 = vmatprep.subr.mxu0 %v746
        %1451 = vmatpush1.msra.mxu0 %v745
        %1452 = vmatprep.subr.mxu0 %v743
        %1453 = vmatpush1.msra.mxu0 %v742
        %1454 = vmatprep.subr.mxu0 %v740
        %1455 = vmatpush1.msra.mxu0 %v739
        %1456 = vmatprep.subr.mxu0 %v737
        %1457 = vmatpush1.msra.mxu0 %v736
        %1458 = vmatprep.subr.mxu0 %v734
        %1459 = vmatpush1.msra.mxu0 %v733
        %1460 = vmatprep.subr.mxu0 %v731
        %1461 = vmatpush1.msra.mxu0 %v730
        %1462 = vmatprep.subr.mxu0 %v728
        %1463 = vmatpush1.msra.mxu0 %v727
        %1464 = vmatprep.subr.mxu0 %v725
        %1465 = vmatpush1.msra.mxu0 %v724
        %1466 = vmatprep.subr.mxu0 %v722
        %1467 = vmatpush1.msra.mxu0 %v721
        %1468 = vmatprep.subr.mxu0 %v719
        %1469 = vmatpush1.msra.mxu0 %v718
        %1470 = vmatprep.subr.mxu0 %v716
        %1471 = vmatpush1.msra.mxu0 %v715
        %1472 = vmatprep.subr.mxu0 %v713
        %1473 = vmatpush1.msra.mxu0 %v712
        %1474 = vmatprep.subr.mxu0 %v710
        %1475 = vmatpush1.msra.mxu0 %v709
        %1476 = vmatprep.subr.mxu0 %v707
        %1477 = vmatpush1.msra.mxu0 %v706
        %1478 = vmatprep.subr.mxu0 %v704
        %1479 = vmatpush1.msra.mxu0 %v703
        %1480 = vmatprep.subr.mxu0 %v701
        %1481 = vmatpush1.msra.mxu0 %v700
        %1482 = vmatprep.subr.mxu0 0.0
        %1483 = vmatpush2.msra.mxu0 0.0
        %1484 = vmatprep.subr.mxu0 0.0
        %1485 = vmatpush2.msra.mxu0 0.0
        %1486 = vmatprep.subr.mxu0 0.0
        %1487 = vmatpush2.msra.mxu0 0.0
        %1488 = vmatprep.subr.mxu0 0.0
        %1489 = vmatpush2.msra.mxu0 0.0
        %1490 = vmatprep.subr.mxu0 0.0
        %1491 = vmatpush2.msra.mxu0 0.0
        %1492 = vmatprep.subr.mxu0 0.0
        %1493 = vmatpush2.msra.mxu0 0.0
        %1494 = vmatprep.subr.mxu0 0.0
        %1495 = vmatpush2.msra.mxu0 0.0
        %1496 = vmatprep.subr.mxu0 0.0
        %1497 = vmatpush2.msra.mxu0 0.0
        %1498 = vmatprep.subr.mxu0 0.0
        %1499 = vmatpush2.msra.mxu0 0.0
        %1500 = vmatprep.subr.mxu0 0.0
        %1501 = vmatpush2.msra.mxu0 0.0
        %1502 = vmatprep.subr.mxu0 0.0
        %1503 = vmatpush2.msra.mxu0 0.0
        %1504 = vmatprep.subr.mxu0 0.0
        %1505 = vmatpush2.msra.mxu0 0.0
        %1506 = vmatprep.subr.mxu0 0.0
        %1507 = vmatpush2.msra.mxu0 0.0
        %1508 = vmatprep.subr.mxu0 0.0
        %1509 = vmatpush2.msra.mxu0 0.0
        %1510 = vmatprep.subr.mxu0 0.0
        %1511 = vmatpush2.msra.mxu0 0.0
        %1512 = vmatprep.subr.mxu0 0.0
        %1513 = vmatpush2.msra.mxu0 0.0
        %1514 = vmatprep.mubr.f32.mxu0 0.0
        %1515 = vmatmul.mubr.f32.gmra.mxu0 %v1437
        %v1516 = vpop.f32.mrf.mxu0
        %v1517 = vadd.f32 0.0, %v1516
        %v1518 = vpop.f32.mrf.mxu0
        %v1519 = vadd.f32 0.0, %v1518
        %1520 = vdwg.mxu0
        %1521 = vmatprep.subr.mxu0 0.0
        %1522 = vmatpush1.msra.mxu0 %v747
        %1523 = vmatprep.subr.mxu0 0.0
        %1524 = vmatpush1.msra.mxu0 %v744
        %1525 = vmatprep.subr.mxu0 0.0
        %1526 = vmatpush1.msra.mxu0 %v741
        %1527 = vmatprep.subr.mxu0 0.0
        %1528 = vmatpush1.msra.mxu0 %v738
        %1529 = vmatprep.subr.mxu0 0.0
        %1530 = vmatpush1.msra.mxu0 %v735
        %1531 = vmatprep.subr.mxu0 0.0
        %1532 = vmatpush1.msra.mxu0 %v732
        %1533 = vmatprep.subr.mxu0 0.0
        %1534 = vmatpush1.msra.mxu0 %v729
        %1535 = vmatprep.subr.mxu0 0.0
        %1536 = vmatpush1.msra.mxu0 %v726
        %1537 = vmatprep.subr.mxu0 0.0
        %1538 = vmatpush1.msra.mxu0 %v723
        %1539 = vmatprep.subr.mxu0 0.0
        %1540 = vmatpush1.msra.mxu0 %v720
        %1541 = vmatprep.subr.mxu0 0.0
        %1542 = vmatpush1.msra.mxu0 %v717
        %1543 = vmatprep.subr.mxu0 0.0
        %1544 = vmatpush1.msra.mxu0 %v714
        %1545 = vmatprep.subr.mxu0 0.0
        %1546 = vmatpush1.msra.mxu0 %v711
        %1547 = vmatprep.subr.mxu0 0.0
        %1548 = vmatpush1.msra.mxu0 %v708
        %1549 = vmatprep.subr.mxu0 0.0
        %1550 = vmatpush1.msra.mxu0 %v705
        %1551 = vmatprep.subr.mxu0 0.0
        %1552 = vmatpush1.msra.mxu0 %v702
        %1553 = vmatprep.subr.mxu0 0.0
        %1554 = vmatpush2.msra.mxu0 0.0
        %1555 = vmatprep.subr.mxu0 0.0
        %1556 = vmatpush2.msra.mxu0 0.0
        %1557 = vmatprep.subr.mxu0 0.0
        %1558 = vmatpush2.msra.mxu0 0.0
        %1559 = vmatprep.subr.mxu0 0.0
        %1560 = vmatpush2.msra.mxu0 0.0
        %1561 = vmatprep.subr.mxu0 0.0
        %1562 = vmatpush2.msra.mxu0 0.0
        %1563 = vmatprep.subr.mxu0 0.0
        %1564 = vmatpush2.msra.mxu0 0.0
        %1565 = vmatprep.subr.mxu0 0.0
        %1566 = vmatpush2.msra.mxu0 0.0
        %1567 = vmatprep.subr.mxu0 0.0
        %1568 = vmatpush2.msra.mxu0 0.0
        %1569 = vmatprep.subr.mxu0 0.0
        %1570 = vmatpush2.msra.mxu0 0.0
        %1571 = vmatprep.subr.mxu0 0.0
        %1572 = vmatpush2.msra.mxu0 0.0
        %1573 = vmatprep.subr.mxu0 0.0
        %1574 = vmatpush2.msra.mxu0 0.0
        %1575 = vmatprep.subr.mxu0 0.0
        %1576 = vmatpush2.msra.mxu0 0.0
        %1577 = vmatprep.subr.mxu0 0.0
        %1578 = vmatpush2.msra.mxu0 0.0
        %1579 = vmatprep.subr.mxu0 0.0
        %1580 = vmatpush2.msra.mxu0 0.0
        %1581 = vmatprep.subr.mxu0 0.0
        %1582 = vmatpush2.msra.mxu0 0.0
        %1583 = vmatprep.subr.mxu0 0.0
        %1584 = vmatpush2.msra.mxu0 0.0
        %1585 = vmatprep.mubr.f32.mxu0 0.0
        %1586 = vmatmul.mubr.f32.gmra.mxu0 %v1437
        %v1587 = vpop.f32.mrf.mxu0
        %v1588 = vadd.f32 0.0, %v1587
        %v1589 = vpop.f32.mrf.mxu0
        %1590 = vdwg.mxu0
        %v1591 = vadd.f32 %v1447, %v1517
        %v1592 = vmul.f32 %v1591, 0.5
        %v1593 = vtanh.pop %v1592
        %v1594 = vadd.f32 %v1593, 1.0
        %v1595 = vmul.f32 %v1594, 0.5
        %v1596 = vadd.f32 %v1448, %v1519
        %v1597 = vmul.f32 %v1596, 0.5
        %v1598 = vtanh.pop %v1597
        %v1599 = vadd.f32 %v1598, 1.0
        %v1600 = vmul.f32 %v1599, 0.5
        %v1601 = vadd.f32 %v1588, %v753
        %v1602 = vmul.f32 %v1595, %v1601
        %v1603 = vadd.f32 %v1449, %v1602
        %v1604 = vtanh.pop %v1603
        %v1605 = vsub.f32 1.0, %v1600
        %v1606 = vmul.f32 %v1605, %v1604
        %v1607 = vmul.f32 %v1600, %v1437
        %v1608 = vadd.f32 %v1606, %v1607
        %s1609 = scalar_lea.vmem %s374, %s1441 [#allocation11]
        %1610 = vst [vmem:[%s1609] sm:$0xff] %v1608
        %s1611 = scalar_select %p755, 5, 2
        %s1612 = smul.u32 %s1611, 8
        %s1613 = sshra.s32 %s1612, 3
        %s1614 = sand.u32 %s1612, 7
        %s1615 = smul.u32 %s1613, 3
        %s1616 = smul.addr %s1615, 8
        %s1617 = scalar_lea.vmem [#allocation2], %s1616
        %v1618 = vld [vmem:[%s1617] sm:$0xff]
        %v1619 = vld [vmem:[%s1617 + $0x8] sm:$0xff]
        %v1620 = vld [vmem:[%s1617 + $0x10] sm:$0xff]
        %1621 = vmatprep.subr.mxu0 %v746
        %1622 = vmatpush1.msra.mxu0 %v745
        %1623 = vmatprep.subr.mxu0 %v743
        %1624 = vmatpush1.msra.mxu0 %v742
        %1625 = vmatprep.subr.mxu0 %v740
        %1626 = vmatpush1.msra.mxu0 %v739
        %1627 = vmatprep.subr.mxu0 %v737
        %1628 = vmatpush1.msra.mxu0 %v736
        %1629 = vmatprep.subr.mxu0 %v734
        %1630 = vmatpush1.msra.mxu0 %v733
        %1631 = vmatprep.subr.mxu0 %v731
        %1632 = vmatpush1.msra.mxu0 %v730
        %1633 = vmatprep.subr.mxu0 %v728
        %1634 = vmatpush1.msra.mxu0 %v727
        %1635 = vmatprep.subr.mxu0 %v725
        %1636 = vmatpush1.msra.mxu0 %v724
        %1637 = vmatprep.subr.mxu0 %v722
        %1638 = vmatpush1.msra.mxu0 %v721
        %1639 = vmatprep.subr.mxu0 %v719
        %1640 = vmatpush1.msra.mxu0 %v718
        %1641 = vmatprep.subr.mxu0 %v716
        %1642 = vmatpush1.msra.mxu0 %v715
        %1643 = vmatprep.subr.mxu0 %v713
        %1644 = vmatpush1.msra.mxu0 %v712
        %1645 = vmatprep.subr.mxu0 %v710
        %1646 = vmatpush1.msra.mxu0 %v709
        %1647 = vmatprep.subr.mxu0 %v707
        %1648 = vmatpush1.msra.mxu0 %v706
        %1649 = vmatprep.subr.mxu0 %v704
        %1650 = vmatpush1.msra.mxu0 %v703
        %1651 = vmatprep.subr.mxu0 %v701
        %1652 = vmatpush1.msra.mxu0 %v700
        %1653 = vmatprep.subr.mxu0 0.0
        %1654 = vmatpush2.msra.mxu0 0.0
        %1655 = vmatprep.subr.mxu0 0.0
        %1656 = vmatpush2.msra.mxu0 0.0
        %1657 = vmatprep.subr.mxu0 0.0
        %1658 = vmatpush2.msra.mxu0 0.0
        %1659 = vmatprep.subr.mxu0 0.0
        %1660 = vmatpush2.msra.mxu0 0.0
        %1661 = vmatprep.subr.mxu0 0.0
        %1662 = vmatpush2.msra.mxu0 0.0
        %1663 = vmatprep.subr.mxu0 0.0
        %1664 = vmatpush2.msra.mxu0 0.0
        %1665 = vmatprep.subr.mxu0 0.0
        %1666 = vmatpush2.msra.mxu0 0.0
        %1667 = vmatprep.subr.mxu0 0.0
        %1668 = vmatpush2.msra.mxu0 0.0
        %1669 = vmatprep.subr.mxu0 0.0
        %1670 = vmatpush2.msra.mxu0 0.0
        %1671 = vmatprep.subr.mxu0 0.0
        %1672 = vmatpush2.msra.mxu0 0.0
        %1673 = vmatprep.subr.mxu0 0.0
        %1674 = vmatpush2.msra.mxu0 0.0
        %1675 = vmatprep.subr.mxu0 0.0
        %1676 = vmatpush2.msra.mxu0 0.0
        %1677 = vmatprep.subr.mxu0 0.0
        %1678 = vmatpush2.msra.mxu0 0.0
        %1679 = vmatprep.subr.mxu0 0.0
        %1680 = vmatpush2.msra.mxu0 0.0
        %1681 = vmatprep.subr.mxu0 0.0
        %1682 = vmatpush2.msra.mxu0 0.0
        %1683 = vmatprep.subr.mxu0 0.0
        %1684 = vmatpush2.msra.mxu0 0.0
        %1685 = vmatprep.mubr.f32.mxu0 0.0
        %1686 = vmatmul.mubr.f32.gmra.mxu0 %v1608
        %v1687 = vpop.f32.mrf.mxu0
        %v1688 = vadd.f32 0.0, %v1687
        %v1689 = vpop.f32.mrf.mxu0
        %v1690 = vadd.f32 0.0, %v1689
        %1691 = vdwg.mxu0
        %1692 = vmatprep.subr.mxu0 0.0
        %1693 = vmatpush1.msra.mxu0 %v747
        %1694 = vmatprep.subr.mxu0 0.0
        %1695 = vmatpush1.msra.mxu0 %v744
        %1696 = vmatprep.subr.mxu0 0.0
        %1697 = vmatpush1.msra.mxu0 %v741
        %1698 = vmatprep.subr.mxu0 0.0
        %1699 = vmatpush1.msra.mxu0 %v738
        %1700 = vmatprep.subr.mxu0 0.0
        %1701 = vmatpush1.msra.mxu0 %v735
        %1702 = vmatprep.subr.mxu0 0.0
        %1703 = vmatpush1.msra.mxu0 %v732
        %1704 = vmatprep.subr.mxu0 0.0
        %1705 = vmatpush1.msra.mxu0 %v729
        %1706 = vmatprep.subr.mxu0 0.0
        %1707 = vmatpush1.msra.mxu0 %v726
        %1708 = vmatprep.subr.mxu0 0.0
        %1709 = vmatpush1.msra.mxu0 %v723
        %1710 = vmatprep.subr.mxu0 0.0
        %1711 = vmatpush1.msra.mxu0 %v720
        %1712 = vmatprep.subr.mxu0 0.0
        %1713 = vmatpush1.msra.mxu0 %v717
        %1714 = vmatprep.subr.mxu0 0.0
        %1715 = vmatpush1.msra.mxu0 %v714
        %1716 = vmatprep.subr.mxu0 0.0
        %1717 = vmatpush1.msra.mxu0 %v711
        %1718 = vmatprep.subr.mxu0 0.0
        %1719 = vmatpush1.msra.mxu0 %v708
        %1720 = vmatprep.subr.mxu0 0.0
        %1721 = vmatpush1.msra.mxu0 %v705
        %1722 = vmatprep.subr.mxu0 0.0
        %1723 = vmatpush1.msra.mxu0 %v702
        %1724 = vmatprep.subr.mxu0 0.0
        %1725 = vmatpush2.msra.mxu0 0.0
        %1726 = vmatprep.subr.mxu0 0.0
        %1727 = vmatpush2.msra.mxu0 0.0
        %1728 = vmatprep.subr.mxu0 0.0
        %1729 = vmatpush2.msra.mxu0 0.0
        %1730 = vmatprep.subr.mxu0 0.0
        %1731 = vmatpush2.msra.mxu0 0.0
        %1732 = vmatprep.subr.mxu0 0.0
        %1733 = vmatpush2.msra.mxu0 0.0
        %1734 = vmatprep.subr.mxu0 0.0
        %1735 = vmatpush2.msra.mxu0 0.0
        %1736 = vmatprep.subr.mxu0 0.0
        %1737 = vmatpush2.msra.mxu0 0.0
        %1738 = vmatprep.subr.mxu0 0.0
        %1739 = vmatpush2.msra.mxu0 0.0
        %1740 = vmatprep.subr.mxu0 0.0
        %1741 = vmatpush2.msra.mxu0 0.0
        %1742 = vmatprep.subr.mxu0 0.0
        %1743 = vmatpush2.msra.mxu0 0.0
        %1744 = vmatprep.subr.mxu0 0.0
        %1745 = vmatpush2.msra.mxu0 0.0
        %1746 = vmatprep.subr.mxu0 0.0
        %1747 = vmatpush2.msra.mxu0 0.0
        %1748 = vmatprep.subr.mxu0 0.0
        %1749 = vmatpush2.msra.mxu0 0.0
        %1750 = vmatprep.subr.mxu0 0.0
        %1751 = vmatpush2.msra.mxu0 0.0
        %1752 = vmatprep.subr.mxu0 0.0
        %1753 = vmatpush2.msra.mxu0 0.0
        %1754 = vmatprep.subr.mxu0 0.0
        %1755 = vmatpush2.msra.mxu0 0.0
        %1756 = vmatprep.mubr.f32.mxu0 0.0
        %1757 = vmatmul.mubr.f32.gmra.mxu0 %v1608
        %v1758 = vpop.f32.mrf.mxu0
        %v1759 = vadd.f32 0.0, %v1758
        %v1760 = vpop.f32.mrf.mxu0
        %1761 = vdwg.mxu0
        %v1762 = vadd.f32 %v1618, %v1688
        %v1763 = vmul.f32 %v1762, 0.5
        %v1764 = vtanh.pop %v1763
        %v1765 = vadd.f32 %v1764, 1.0
        %v1766 = vmul.f32 %v1765, 0.5
        %v1767 = vadd.f32 %v1619, %v1690
        %v1768 = vmul.f32 %v1767, 0.5
        %v1769 = vtanh.pop %v1768
        %v1770 = vadd.f32 %v1769, 1.0
        %v1771 = vmul.f32 %v1770, 0.5
        %v1772 = vadd.f32 %v1759, %v753
        %v1773 = vmul.f32 %v1766, %v1772
        %v1774 = vadd.f32 %v1620, %v1773
        %v1775 = vtanh.pop %v1774
        %v1776 = vsub.f32 1.0, %v1771
        %v1777 = vmul.f32 %v1776, %v1775
        %v1778 = vmul.f32 %v1771, %v1608
        %v1779 = vadd.f32 %v1777, %v1778
        %s1780 = scalar_lea.vmem %s374, %s1612 [#allocation11]
        %1781 = vst [vmem:[%s1780] sm:$0xff] %v1779
        %s1782 = scalar_select %p755, 6, 1
        %s1783 = smul.u32 %s1782, 8
        %s1784 = sshra.s32 %s1783, 3
        %s1785 = sand.u32 %s1783, 7
        %s1786 = smul.u32 %s1784, 3
        %s1787 = smul.addr %s1786, 8
        %s1788 = scalar_lea.vmem [#allocation2], %s1787
        %v1789 = vld [vmem:[%s1788] sm:$0xff]
        %v1790 = vld [vmem:[%s1788 + $0x8] sm:$0xff]
        %v1791 = vld [vmem:[%s1788 + $0x10] sm:$0xff]
        %1792 = vmatprep.subr.mxu0 %v746
        %1793 = vmatpush1.msra.mxu0 %v745
        %1794 = vmatprep.subr.mxu0 %v743
        %1795 = vmatpush1.msra.mxu0 %v742
        %1796 = vmatprep.subr.mxu0 %v740
        %1797 = vmatpush1.msra.mxu0 %v739
        %1798 = vmatprep.subr.mxu0 %v737
        %1799 = vmatpush1.msra.mxu0 %v736
        %1800 = vmatprep.subr.mxu0 %v734
        %1801 = vmatpush1.msra.mxu0 %v733
        %1802 = vmatprep.subr.mxu0 %v731
        %1803 = vmatpush1.msra.mxu0 %v730
        %1804 = vmatprep.subr.mxu0 %v728
        %1805 = vmatpush1.msra.mxu0 %v727
        %1806 = vmatprep.subr.mxu0 %v725
        %1807 = vmatpush1.msra.mxu0 %v724
        %1808 = vmatprep.subr.mxu0 %v722
        %1809 = vmatpush1.msra.mxu0 %v721
        %1810 = vmatprep.subr.mxu0 %v719
        %1811 = vmatpush1.msra.mxu0 %v718
        %1812 = vmatprep.subr.mxu0 %v716
        %1813 = vmatpush1.msra.mxu0 %v715
        %1814 = vmatprep.subr.mxu0 %v713
        %1815 = vmatpush1.msra.mxu0 %v712
        %1816 = vmatprep.subr.mxu0 %v710
        %1817 = vmatpush1.msra.mxu0 %v709
        %1818 = vmatprep.subr.mxu0 %v707
        %1819 = vmatpush1.msra.mxu0 %v706
        %1820 = vmatprep.subr.mxu0 %v704
        %1821 = vmatpush1.msra.mxu0 %v703
        %1822 = vmatprep.subr.mxu0 %v701
        %1823 = vmatpush1.msra.mxu0 %v700
        %1824 = vmatprep.subr.mxu0 0.0
        %1825 = vmatpush2.msra.mxu0 0.0
        %1826 = vmatprep.subr.mxu0 0.0
        %1827 = vmatpush2.msra.mxu0 0.0
        %1828 = vmatprep.subr.mxu0 0.0
        %1829 = vmatpush2.msra.mxu0 0.0
        %1830 = vmatprep.subr.mxu0 0.0
        %1831 = vmatpush2.msra.mxu0 0.0
        %1832 = vmatprep.subr.mxu0 0.0
        %1833 = vmatpush2.msra.mxu0 0.0
        %1834 = vmatprep.subr.mxu0 0.0
        %1835 = vmatpush2.msra.mxu0 0.0
        %1836 = vmatprep.subr.mxu0 0.0
        %1837 = vmatpush2.msra.mxu0 0.0
        %1838 = vmatprep.subr.mxu0 0.0
        %1839 = vmatpush2.msra.mxu0 0.0
        %1840 = vmatprep.subr.mxu0 0.0
        %1841 = vmatpush2.msra.mxu0 0.0
        %1842 = vmatprep.subr.mxu0 0.0
        %1843 = vmatpush2.msra.mxu0 0.0
        %1844 = vmatprep.subr.mxu0 0.0
        %1845 = vmatpush2.msra.mxu0 0.0
        %1846 = vmatprep.subr.mxu0 0.0
        %1847 = vmatpush2.msra.mxu0 0.0
        %1848 = vmatprep.subr.mxu0 0.0
        %1849 = vmatpush2.msra.mxu0 0.0
        %1850 = vmatprep.subr.mxu0 0.0
        %1851 = vmatpush2.msra.mxu0 0.0
        %1852 = vmatprep.subr.mxu0 0.0
        %1853 = vmatpush2.msra.mxu0 0.0
        %1854 = vmatprep.subr.mxu0 0.0
        %1855 = vmatpush2.msra.mxu0 0.0
        %1856 = vmatprep.mubr.f32.mxu0 0.0
        %1857 = vmatmul.mubr.f32.gmra.mxu0 %v1779
        %v1858 = vpop.f32.mrf.mxu0
        %v1859 = vadd.f32 0.0, %v1858
        %v1860 = vpop.f32.mrf.mxu0
        %v1861 = vadd.f32 0.0, %v1860
        %1862 = vdwg.mxu0
        %1863 = vmatprep.subr.mxu0 0.0
        %1864 = vmatpush1.msra.mxu0 %v747
        %1865 = vmatprep.subr.mxu0 0.0
        %1866 = vmatpush1.msra.mxu0 %v744
        %1867 = vmatprep.subr.mxu0 0.0
        %1868 = vmatpush1.msra.mxu0 %v741
        %1869 = vmatprep.subr.mxu0 0.0
        %1870 = vmatpush1.msra.mxu0 %v738
        %1871 = vmatprep.subr.mxu0 0.0
        %1872 = vmatpush1.msra.mxu0 %v735
        %1873 = vmatprep.subr.mxu0 0.0
        %1874 = vmatpush1.msra.mxu0 %v732
        %1875 = vmatprep.subr.mxu0 0.0
        %1876 = vmatpush1.msra.mxu0 %v729
        %1877 = vmatprep.subr.mxu0 0.0
        %1878 = vmatpush1.msra.mxu0 %v726
        %1879 = vmatprep.subr.mxu0 0.0
        %1880 = vmatpush1.msra.mxu0 %v723
        %1881 = vmatprep.subr.mxu0 0.0
        %1882 = vmatpush1.msra.mxu0 %v720
        %1883 = vmatprep.subr.mxu0 0.0
        %1884 = vmatpush1.msra.mxu0 %v717
        %1885 = vmatprep.subr.mxu0 0.0
        %1886 = vmatpush1.msra.mxu0 %v714
        %1887 = vmatprep.subr.mxu0 0.0
        %1888 = vmatpush1.msra.mxu0 %v711
        %1889 = vmatprep.subr.mxu0 0.0
        %1890 = vmatpush1.msra.mxu0 %v708
        %1891 = vmatprep.subr.mxu0 0.0
        %1892 = vmatpush1.msra.mxu0 %v705
        %1893 = vmatprep.subr.mxu0 0.0
        %1894 = vmatpush1.msra.mxu0 %v702
        %1895 = vmatprep.subr.mxu0 0.0
        %1896 = vmatpush2.msra.mxu0 0.0
        %1897 = vmatprep.subr.mxu0 0.0
        %1898 = vmatpush2.msra.mxu0 0.0
        %1899 = vmatprep.subr.mxu0 0.0
        %1900 = vmatpush2.msra.mxu0 0.0
        %1901 = vmatprep.subr.mxu0 0.0
        %1902 = vmatpush2.msra.mxu0 0.0
        %1903 = vmatprep.subr.mxu0 0.0
        %1904 = vmatpush2.msra.mxu0 0.0
        %1905 = vmatprep.subr.mxu0 0.0
        %1906 = vmatpush2.msra.mxu0 0.0
        %1907 = vmatprep.subr.mxu0 0.0
        %1908 = vmatpush2.msra.mxu0 0.0
        %1909 = vmatprep.subr.mxu0 0.0
        %1910 = vmatpush2.msra.mxu0 0.0
        %1911 = vmatprep.subr.mxu0 0.0
        %1912 = vmatpush2.msra.mxu0 0.0
        %1913 = vmatprep.subr.mxu0 0.0
        %1914 = vmatpush2.msra.mxu0 0.0
        %1915 = vmatprep.subr.mxu0 0.0
        %1916 = vmatpush2.msra.mxu0 0.0
        %1917 = vmatprep.subr.mxu0 0.0
        %1918 = vmatpush2.msra.mxu0 0.0
        %1919 = vmatprep.subr.mxu0 0.0
        %1920 = vmatpush2.msra.mxu0 0.0
        %1921 = vmatprep.subr.mxu0 0.0
        %1922 = vmatpush2.msra.mxu0 0.0
        %1923 = vmatprep.subr.mxu0 0.0
        %1924 = vmatpush2.msra.mxu0 0.0
        %1925 = vmatprep.subr.mxu0 0.0
        %1926 = vmatpush2.msra.mxu0 0.0
        %1927 = vmatprep.mubr.f32.mxu0 0.0
        %1928 = vmatmul.mubr.f32.gmra.mxu0 %v1779
        %v1929 = vpop.f32.mrf.mxu0
        %v1930 = vadd.f32 0.0, %v1929
        %v1931 = vpop.f32.mrf.mxu0
        %1932 = vdwg.mxu0
        %v1933 = vadd.f32 %v1789, %v1859
        %v1934 = vmul.f32 %v1933, 0.5
        %v1935 = vtanh.pop %v1934
        %v1936 = vadd.f32 %v1935, 1.0
        %v1937 = vmul.f32 %v1936, 0.5
        %v1938 = vadd.f32 %v1790, %v1861
        %v1939 = vmul.f32 %v1938, 0.5
        %v1940 = vtanh.pop %v1939
        %v1941 = vadd.f32 %v1940, 1.0
        %v1942 = vmul.f32 %v1941, 0.5
        %v1943 = vadd.f32 %v1930, %v753
        %v1944 = vmul.f32 %v1937, %v1943
        %v1945 = vadd.f32 %v1791, %v1944
        %v1946 = vtanh.pop %v1945
        %v1947 = vsub.f32 1.0, %v1942
        %v1948 = vmul.f32 %v1947, %v1946
        %v1949 = vmul.f32 %v1942, %v1779
        %v1950 = vadd.f32 %v1948, %v1949
        %s1951 = scalar_lea.vmem %s374, %s1783 [#allocation11]
        %1952 = vst [vmem:[%s1951] sm:$0xff] %v1950
        %s1953 = scalar_select %p755, 7, 0
        %s1954 = smul.u32 %s1953, 8
        %s1955 = sshra.s32 %s1954, 3
        %s1956 = sand.u32 %s1954, 7
        %s1957 = smul.u32 %s1955, 3
        %s1958 = smul.addr %s1957, 8
        %s1959 = scalar_lea.vmem [#allocation2], %s1958
        %v1960 = vld [vmem:[%s1959] sm:$0xff]
        %v1961 = vld [vmem:[%s1959 + $0x8] sm:$0xff]
        %v1962 = vld [vmem:[%s1959 + $0x10] sm:$0xff]
        %1963 = vmatprep.subr.mxu0 %v746
        %1964 = vmatpush1.msra.mxu0 %v745
        %1965 = vmatprep.subr.mxu0 %v743
        %1966 = vmatpush1.msra.mxu0 %v742
        %1967 = vmatprep.subr.mxu0 %v740
        %1968 = vmatpush1.msra.mxu0 %v739
        %1969 = vmatprep.subr.mxu0 %v737
        %1970 = vmatpush1.msra.mxu0 %v736
        %1971 = vmatprep.subr.mxu0 %v734
        %1972 = vmatpush1.msra.mxu0 %v733
        %1973 = vmatprep.subr.mxu0 %v731
        %1974 = vmatpush1.msra.mxu0 %v730
        %1975 = vmatprep.subr.mxu0 %v728
        %1976 = vmatpush1.msra.mxu0 %v727
        %1977 = vmatprep.subr.mxu0 %v725
        %1978 = vmatpush1.msra.mxu0 %v724
        %1979 = vmatprep.subr.mxu0 %v722
        %1980 = vmatpush1.msra.mxu0 %v721
        %1981 = vmatprep.subr.mxu0 %v719
        %1982 = vmatpush1.msra.mxu0 %v718
        %1983 = vmatprep.subr.mxu0 %v716
        %1984 = vmatpush1.msra.mxu0 %v715
        %1985 = vmatprep.subr.mxu0 %v713
        %1986 = vmatpush1.msra.mxu0 %v712
        %1987 = vmatprep.subr.mxu0 %v710
        %1988 = vmatpush1.msra.mxu0 %v709
        %1989 = vmatprep.subr.mxu0 %v707
        %1990 = vmatpush1.msra.mxu0 %v706
        %1991 = vmatprep.subr.mxu0 %v704
        %1992 = vmatpush1.msra.mxu0 %v703
        %1993 = vmatprep.subr.mxu0 %v701
        %1994 = vmatpush1.msra.mxu0 %v700
        %1995 = vmatprep.subr.mxu0 0.0
        %1996 = vmatpush2.msra.mxu0 0.0
        %1997 = vmatprep.subr.mxu0 0.0
        %1998 = vmatpush2.msra.mxu0 0.0
        %1999 = vmatprep.subr.mxu0 0.0
        %2000 = vmatpush2.msra.mxu0 0.0
        %2001 = vmatprep.subr.mxu0 0.0
        %2002 = vmatpush2.msra.mxu0 0.0
        %2003 = vmatprep.subr.mxu0 0.0
        %2004 = vmatpush2.msra.mxu0 0.0
        %2005 = vmatprep.subr.mxu0 0.0
        %2006 = vmatpush2.msra.mxu0 0.0
        %2007 = vmatprep.subr.mxu0 0.0
        %2008 = vmatpush2.msra.mxu0 0.0
        %2009 = vmatprep.subr.mxu0 0.0
        %2010 = vmatpush2.msra.mxu0 0.0
        %2011 = vmatprep.subr.mxu0 0.0
        %2012 = vmatpush2.msra.mxu0 0.0
        %2013 = vmatprep.subr.mxu0 0.0
        %2014 = vmatpush2.msra.mxu0 0.0
        %2015 = vmatprep.subr.mxu0 0.0
        %2016 = vmatpush2.msra.mxu0 0.0
        %2017 = vmatprep.subr.mxu0 0.0
        %2018 = vmatpush2.msra.mxu0 0.0
        %2019 = vmatprep.subr.mxu0 0.0
        %2020 = vmatpush2.msra.mxu0 0.0
        %2021 = vmatprep.subr.mxu0 0.0
        %2022 = vmatpush2.msra.mxu0 0.0
        %2023 = vmatprep.subr.mxu0 0.0
        %2024 = vmatpush2.msra.mxu0 0.0
        %2025 = vmatprep.subr.mxu0 0.0
        %2026 = vmatpush2.msra.mxu0 0.0
        %2027 = vmatprep.mubr.f32.mxu0 0.0
        %2028 = vmatmul.mubr.f32.gmra.mxu0 %v1950
        %v2029 = vpop.f32.mrf.mxu0
        %v2030 = vadd.f32 0.0, %v2029
        %v2031 = vpop.f32.mrf.mxu0
        %v2032 = vadd.f32 0.0, %v2031
        %2033 = vdwg.mxu0
        %2034 = vmatprep.subr.mxu0 0.0
        %2035 = vmatpush1.msra.mxu0 %v747
        %2036 = vmatprep.subr.mxu0 0.0
        %2037 = vmatpush1.msra.mxu0 %v744
        %2038 = vmatprep.subr.mxu0 0.0
        %2039 = vmatpush1.msra.mxu0 %v741
        %2040 = vmatprep.subr.mxu0 0.0
        %2041 = vmatpush1.msra.mxu0 %v738
        %2042 = vmatprep.subr.mxu0 0.0
        %2043 = vmatpush1.msra.mxu0 %v735
        %2044 = vmatprep.subr.mxu0 0.0
        %2045 = vmatpush1.msra.mxu0 %v732
        %2046 = vmatprep.subr.mxu0 0.0
        %2047 = vmatpush1.msra.mxu0 %v729
        %2048 = vmatprep.subr.mxu0 0.0
        %2049 = vmatpush1.msra.mxu0 %v726
        %2050 = vmatprep.subr.mxu0 0.0
        %2051 = vmatpush1.msra.mxu0 %v723
        %2052 = vmatprep.subr.mxu0 0.0
        %2053 = vmatpush1.msra.mxu0 %v720
        %2054 = vmatprep.subr.mxu0 0.0
        %2055 = vmatpush1.msra.mxu0 %v717
        %2056 = vmatprep.subr.mxu0 0.0
        %2057 = vmatpush1.msra.mxu0 %v714
        %2058 = vmatprep.subr.mxu0 0.0
        %2059 = vmatpush1.msra.mxu0 %v711
        %2060 = vmatprep.subr.mxu0 0.0
        %2061 = vmatpush1.msra.mxu0 %v708
        %2062 = vmatprep.subr.mxu0 0.0
        %2063 = vmatpush1.msra.mxu0 %v705
        %2064 = vmatprep.subr.mxu0 0.0
        %2065 = vmatpush1.msra.mxu0 %v702
        %2066 = vmatprep.subr.mxu0 0.0
        %2067 = vmatpush2.msra.mxu0 0.0
        %2068 = vmatprep.subr.mxu0 0.0
        %2069 = vmatpush2.msra.mxu0 0.0
        %2070 = vmatprep.subr.mxu0 0.0
        %2071 = vmatpush2.msra.mxu0 0.0
        %2072 = vmatprep.subr.mxu0 0.0
        %2073 = vmatpush2.msra.mxu0 0.0
        %2074 = vmatprep.subr.mxu0 0.0
        %2075 = vmatpush2.msra.mxu0 0.0
        %2076 = vmatprep.subr.mxu0 0.0
        %2077 = vmatpush2.msra.mxu0 0.0
        %2078 = vmatprep.subr.mxu0 0.0
        %2079 = vmatpush2.msra.mxu0 0.0
        %2080 = vmatprep.subr.mxu0 0.0
        %2081 = vmatpush2.msra.mxu0 0.0
        %2082 = vmatprep.subr.mxu0 0.0
        %2083 = vmatpush2.msra.mxu0 0.0
        %2084 = vmatprep.subr.mxu0 0.0
        %2085 = vmatpush2.msra.mxu0 0.0
        %2086 = vmatprep.subr.mxu0 0.0
        %2087 = vmatpush2.msra.mxu0 0.0
        %2088 = vmatprep.subr.mxu0 0.0
        %2089 = vmatpush2.msra.mxu0 0.0
        %2090 = vmatprep.subr.mxu0 0.0
        %2091 = vmatpush2.msra.mxu0 0.0
        %2092 = vmatprep.subr.mxu0 0.0
        %2093 = vmatpush2.msra.mxu0 0.0
        %2094 = vmatprep.subr.mxu0 0.0
        %2095 = vmatpush2.msra.mxu0 0.0
        %2096 = vmatprep.subr.mxu0 0.0
        %2097 = vmatpush2.msra.mxu0 0.0
        %2098 = vmatprep.mubr.f32.mxu0 0.0
        %2099 = vmatmul.mubr.f32.gmra.mxu0 %v1950
        %v2100 = vpop.f32.mrf.mxu0
        %v2101 = vadd.f32 0.0, %v2100
        %v2102 = vpop.f32.mrf.mxu0
        %2103 = vdwg.mxu0
        %v2104 = vadd.f32 %v1960, %v2030
        %v2105 = vmul.f32 %v2104, 0.5
        %v2106 = vtanh.pop %v2105
        %v2107 = vadd.f32 %v2106, 1.0
        %v2108 = vmul.f32 %v2107, 0.5
        %v2109 = vadd.f32 %v1961, %v2032
        %v2110 = vmul.f32 %v2109, 0.5
        %v2111 = vtanh.pop %v2110
        %v2112 = vadd.f32 %v2111, 1.0
        %v2113 = vmul.f32 %v2112, 0.5
        %v2114 = vadd.f32 %v2101, %v753
        %v2115 = vmul.f32 %v2108, %v2114
        %v2116 = vadd.f32 %v1962, %v2115
        %v2117 = vtanh.pop %v2116
        %v2118 = vsub.f32 1.0, %v2113
        %v2119 = vmul.f32 %v2118, %v2117
        %v2120 = vmul.f32 %v2113, %v1950
        %v2121 = vadd.f32 %v2119, %v2120
        %s2122 = scalar_lea.vmem %s374, %s1954 [#allocation11]
        %2123 = vst [vmem:[%s2122] sm:$0xff] %v2121
        %2124 = vst [vmem:[%s381] sm:$0xff] %v2121
        %s2125 = sand.u32 %s164, 1
        %s2126 = scalar_lea.sflag [#allocation5], %s2125
        %s2127 = sand.u32 %s164, 1
        %s2128 = smul.addr %s2127, 64
        %s2129 = scalar_lea.vmem [#allocation11], %s2128
        %s2130 = sand.u32 %s190, 1
        %s2131 = scalar_lea.sflag [#allocation13], %s2130
        %s2132 = sand.u32 %s190, 1
        %s2133 = smul.addr %s2132, 8
        %s2134 = scalar_lea.vmem [#allocation12], %s2133
        // Predicated region
        $region57: #{tpu_custom_call.1} parent=39 // pred_check
          %p2135 = pneg %p174
        $region58: #{tpu_custom_call.1} parent=39 // pred_check_branch
          %2137 = sbr.rel (%p2135) target = $region60
        $region59: #{tpu_custom_call.1} parent=39 // pred_region
          %s2139 = ssub.s32 1024, 1024
          %2140 = vsyncadd %s2126, %s2139
          %s2141 = smul.addr %s31, 128
          %s2142 = scalar_lea.hbm %s5, %s2141
          %s2143 = sshll.u32 %s2129, 4
          %s2144 = int_to_ptr.vmem [resolvable:$true] %s2143
          %2149 = dma.vmem_to_hbm [thread:$0]  %s2144, 1024, %s2142, %s2126, 128, 256, 8
        $region60: #{tpu_custom_call.1} parent=39 // pred_fallthru
          _
        // Predicated region
        $region61: #{tpu_custom_call.1} parent=39 // pred_check
          %p2150 = pneg %p200
        $region62: #{tpu_custom_call.1} parent=39 // pred_check_branch
          %2152 = sbr.rel (%p2150) target = $region64
        $region63: #{tpu_custom_call.1} parent=39 // pred_region
          %s2154 = ssub.s32 128, 128
          %2155 = vsyncadd %s2131, %s2154
          %s2156 = smul.addr %s31, 128
          %s2157 = scalar_lea.hbm %s6, %s2156
          %s2159 = sshll.u32 %s2134, 4
          %s2160 = int_to_ptr.vmem [resolvable:$true] %s2159
          %2162 = dma.vmem_to_hbm [thread:$0]  %s2160, 128, %s2157, %s2131
        $region64: #{tpu_custom_call.1} parent=39 // pred_fallthru
          _
      $region40: #{tpu_custom_call.1} parent=5 // pred_fallthru
        _
      %p2163 = scmp.le.s32.totalorder 2, %s26
      // Predicated region
      $region65: #{tpu_custom_call.1} parent=5 // pred_check
        %p2164 = pneg %p2163
      $region66: #{tpu_custom_call.1} parent=5 // pred_check_branch
        %2166 = sbr.rel (%p2164) target = $region68
      $region67: #{tpu_custom_call.1} parent=5 // pred_region
        %s2167 = ssub.s32 %s26, 2
        // Predicated region
        $region69: #{tpu_custom_call.1} parent=67 // pred_check
          %p2168 = pneg %p180
        $region70: #{tpu_custom_call.1} parent=67 // pred_check_branch
          %2170 = sbr.rel (%p2168) target = $region72
        $region71: #{tpu_custom_call.1} parent=67 // pred_region
          %s2171 = sand.u32 %s165, 1
          %s2172 = scalar_lea.sflag [#allocation5], %s2171
          %s2173 = sand.u32 %s165, 1
          %s2174 = smul.addr %s2173, 64
          %s2175 = scalar_lea.vmem [#allocation11], %s2174
          %2176 = dma.done %s2172, 1024
        $region72: #{tpu_custom_call.1} parent=67 // pred_fallthru
          _
        // Predicated region
        $region73: #{tpu_custom_call.1} parent=67 // pred_check
          %p2177 = pneg %p206
        $region74: #{tpu_custom_call.1} parent=67 // pred_check_branch
          %2179 = sbr.rel (%p2177) target = $region76
        $region75: #{tpu_custom_call.1} parent=67 // pred_region
          %s2180 = sand.u32 %s191, 1
          %s2181 = scalar_lea.sflag [#allocation13], %s2180
          %s2182 = sand.u32 %s191, 1
          %s2183 = smul.addr %s2182, 8
          %s2184 = scalar_lea.vmem [#allocation12], %s2183
          %2185 = dma.done %s2181, 128
        $region76: #{tpu_custom_call.1} parent=67 // pred_fallthru
          _
      $region68: #{tpu_custom_call.1} parent=5 // pred_fallthru
        _
    $region6: #{tpu_custom_call.1} parent=1 // loop_footer
      %s30 = sadd.s32 1, %s26
    $region7: #{tpu_custom_call.1} parent=1 // loop_footer_branch
      %25 = sbr.rel target = $region3
    $region8: #{tpu_custom_call.1} parent=1 // loop_exit
      _
    %2186 = vsyncpa [#allocation4], 1
    %s2187 = scalar_lea.sflag [#allocation4], 1
    %2188 = vsyncpa %s2187, 1
    %2189 = vsyncpa [#allocation7], 1
    %s2190 = scalar_lea.sflag [#allocation7], 1
    %2191 = vsyncpa %s2190, 1
    %2192 = vsyncpa [#allocation10], 1
    %s2193 = scalar_lea.sflag [#allocation10], 1
    %2194 = vsyncpa %s2193, 1
    %2195 = vsyncpa [#allocation5], 1
    %s2196 = scalar_lea.sflag [#allocation5], 1
    %2197 = vsyncpa %s2196, 1
    %2198 = vsyncpa [#allocation13], 1
    %s2199 = scalar_lea.sflag [#allocation13], 1
    %2200 = vsyncpa %s2199, 1

</llo_original>
